<compile_context>
chip_gen: v7x
topology: tpu7x:2x2x1
jax: 0.10.0
libtpu: 0.0.40
codegen_flags: <defaults>
</compile_context>

<pallas_src>
import jax
import jax.numpy as jnp
from jax.experimental import pallas as pl
from jax.experimental.pallas import tpu as pltpu


def _qnet_kernel(s_ref, a_ref,
                 ws1_ref, wa1_ref, b1_ref, w2_ref, b2_ref, w3_ref,
                 ws2_ref, wa2_ref, b4_ref, w5_ref, b5_ref, w6_ref,
                 bq_ref, out_ref):
    # Cast batch tiles once; weights are already bf16.  Matmuls accumulate f32.
    s = s_ref[...].astype(jnp.bfloat16)
    a = a_ref[...].astype(jnp.bfloat16)

    def head(ws_ref, wa_ref, b1_r, w2_r, b2_r, w3_r):
        # Concat-free layer 1: [s|a] @ [Ws; Wa] == s @ Ws + a @ Wa.
        h = jnp.dot(s, ws_ref[...], preferred_element_type=jnp.float32)
        h = h + jnp.dot(a, wa_ref[...], preferred_element_type=jnp.float32)
        # Bias + ReLU in f32 (no bf16 VPU on v5e); narrow only the MXU operand.
        h = jnp.maximum(h + b1_r[...], 0.0).astype(jnp.bfloat16)
        # Layer 2: per-head (H, H) dot -- no block-diagonal zeros on the MXU.
        h = jnp.dot(h, w2_r[...], preferred_element_type=jnp.float32) + b2_r[...]
        h = jnp.maximum(h, 0.0).astype(jnp.bfloat16)
        # Output weight is (H, 2) with the other head's column zeroed, so the
        # MXU packs this head's scalar into its own lane of the (tb, 2) result.
        return jnp.dot(h, w3_r[...], preferred_element_type=jnp.float32)

    q = head(ws1_ref, wa1_ref, b1_ref, w2_ref, b2_ref, w3_ref)
    q = q + head(ws2_ref, wa2_ref, b4_ref, w5_ref, b5_ref, w6_ref)
    # Single lane-packed (tb, 2) store: lane 0 = q1, lane 1 = q2 (b3|b6 folded).
    out_ref[...] = q + bq_ref[...]


def _xavier_uniform(key, fan_in, fan_out, gain=1.0):
    # Matches torch.nn.init.xavier_uniform_ (gain=1): U(-a, a), a = sqrt(6/(fan_in+fan_out)).
    a = gain * jnp.sqrt(6.0 / (fan_in + fan_out))
    # Stored as (in, out) so the kernel computes x @ W (== PyTorch x @ W.T).
    return jax.random.uniform(key, (fan_in, fan_out), jnp.float32, minval=-a, maxval=a)


def init_qnetwork_params(key, num_inputs, num_actions, hidden_dim):
    """Per-layer params matching the PyTorch module (weights as (in, out), f32)."""
    din = num_inputs + num_actions
    ks = jax.random.split(key, 6)
    return {
        "w1": _xavier_uniform(ks[0], din, hidden_dim),
        "b1": jnp.zeros((hidden_dim,), jnp.float32),
        "w2": _xavier_uniform(ks[1], hidden_dim, hidden_dim),
        "b2": jnp.zeros((hidden_dim,), jnp.float32),
        "w3": _xavier_uniform(ks[2], hidden_dim, 1),
        "b3": jnp.zeros((1,), jnp.float32),
        "w4": _xavier_uniform(ks[3], din, hidden_dim),
        "b4": jnp.zeros((hidden_dim,), jnp.float32),
        "w5": _xavier_uniform(ks[4], hidden_dim, hidden_dim),
        "b5": jnp.zeros((hidden_dim,), jnp.float32),
        "w6": _xavier_uniform(ks[5], hidden_dim, 1),
        "b6": jnp.zeros((1,), jnp.float32),
    }


def pack_qnetwork_params(params, num_inputs, num_actions, hidden_dim,
                         weight_dtype=jnp.bfloat16):
    """One-time packing: per-head, concat-free layout with bf16 MXU weights."""
    H = hidden_dim

    def split_l1(w):
        # Row-split the layer-1 weight into state / action blocks (concat-free).
        return w[:num_inputs].astype(weight_dtype), w[num_inputs:].astype(weight_dtype)

    ws1, wa1 = split_l1(params["w1"])
    ws2, wa2 = split_l1(params["w4"])
    # Output weights padded to 2 lanes so the MXU writes q1 -> lane 0, q2 -> lane 1.
    w3 = jnp.zeros((H, 2), jnp.float32).at[:, 0].set(params["w3"][:, 0]).astype(weight_dtype)
    w6 = jnp.zeros((H, 2), jnp.float32).at[:, 1].set(params["w6"][:, 0]).astype(weight_dtype)
    return {
        "ws1": ws1, "wa1": wa1, "b1": params["b1"][None, :].astype(jnp.float32),
        "w2": params["w2"].astype(weight_dtype), "b2": params["b2"][None, :].astype(jnp.float32),
        "w3": w3,
        "ws2": ws2, "wa2": wa2, "b4": params["b4"][None, :].astype(jnp.float32),
        "w5": params["w5"].astype(weight_dtype), "b5": params["b5"][None, :].astype(jnp.float32),
        "w6": w6,
        "bq": jnp.concatenate([params["b3"], params["b6"]])[None, :].astype(jnp.float32),
    }


def qnetwork_forward(fused, state, action, *, tile_b=4096):
    """Pallas-backed forward. Returns (q1, q2), each (B, 1) float32."""
    state = state.astype(jnp.float32)
    action = action.astype(jnp.float32)
    B, ni = state.shape
    na = action.shape[1]
    H = fused["w2"].shape[0]

    # Batch tile: multiple of 256 (v6e MXU LHS pass; also a multiple of 128 for
    # v5e and of 8 for the sublane rule).  Default 4096 keeps the live f32
    # activations comfortably inside v7x's 64 MiB VMEM; don't tile larger than
    # the (padded) batch itself.
    tb = max(256, (int(tile_b) // 256) * 256)
    tb = min(tb, -(-B // 256) * 256)
    padded_b = -(-B // tb) * tb
    if padded_b != B:
        pad = padded_b - B
        state = jnp.pad(state, ((0, pad), (0, 0)))
        action = jnp.pad(action, ((0, pad), (0, 0)))
    grid = (padded_b // tb,)

    # Cost estimate: per-head layer1 (din x H) + layer2 (H x H) + out (H x 2).
    flops = 2 * padded_b * 2 * ((ni + na) * H + H * H + H * 2)
    bytes_accessed = (
        4 * padded_b * (ni + na + 2)                      # f32 activations in/out
        + 2 * 2 * ((ni + na) * H + H * H + H * 2)          # bf16 weights (both heads)
        + 4 * (4 * H + 2)                                  # f32 biases
    )

    def batched(cols):
        return pl.BlockSpec((tb, cols), lambda i: (i, 0))

    def resident(arr):
        return pl.BlockSpec(arr.shape, lambda i: (0, 0))

    operands = (
        state, action,
        fused["ws1"], fused["wa1"], fused["b1"], fused["w2"], fused["b2"], fused["w3"],
        fused["ws2"], fused["wa2"], fused["b4"], fused["w5"], fused["b5"], fused["w6"],
        fused["bq"],
    )

    out = pl.pallas_call(
        _qnet_kernel,
        out_shape=jax.ShapeDtypeStruct((padded_b, 2), jnp.float32),
        grid=grid,
        in_specs=[batched(ni), batched(na)] + [resident(w) for w in operands[2:]],
        out_specs=pl.BlockSpec((tb, 2), lambda i: (i, 0)),
        compiler_params=pltpu.CompilerParams(
            dimension_semantics=("parallel",),          # shards batch tiles across v7x TCs
            vmem_limit_bytes=48 * 1024 * 1024),
        cost_estimate=pl.CostEstimate(
            flops=flops, transcendentals=0, bytes_accessed=bytes_accessed),
    )(*operands)

    q = out[:B]
    return q[:, 0:1], q[:, 1:2]
    # TODO(synk): the (tb, 2) output stays lane-narrow (masked vst); a lane-dense
    # (2, B) layout needs an in-kernel transpose and is a secondary, v5e-only win.


def _reference_forward(params, state, action):
    """Pure-f32 reference matching the PyTorch module exactly."""
    xu = jnp.concatenate([state, action], axis=1)
    h1 = jax.nn.relu(xu @ params["w1"] + params["b1"])
    h1 = jax.nn.relu(h1 @ params["w2"] + params["b2"])
    q1 = h1 @ params["w3"] + params["b3"]
    h2 = jax.nn.relu(xu @ params["w4"] + params["b4"])
    h2 = jax.nn.relu(h2 @ params["w5"] + params["b5"])
    q2 = h2 @ params["w6"] + params["b6"]
    return q1, q2


def _bf16_reference_forward(fused, state, action):
    """Reference with the same bf16-operand / f32-accumulate recipe as the kernel."""
    s = state.astype(jnp.bfloat16)
    a = action.astype(jnp.bfloat16)

    def head(ws, wa, b1, w2, b2, w3):
        h = (jnp.dot(s, ws, preferred_element_type=jnp.float32)
             + jnp.dot(a, wa, preferred_element_type=jnp.float32))
        h = jnp.maximum(h + b1, 0.0).astype(jnp.bfloat16)
        h = jnp.maximum(jnp.dot(h, w2, preferred_element_type=jnp.float32) + b2, 0.0)
        h = h.astype(jnp.bfloat16)
        return jnp.dot(h, w3, preferred_element_type=jnp.float32)

    q = (head(fused["ws1"], fused["wa1"], fused["b1"], fused["w2"], fused["b2"], fused["w3"])
         + head(fused["ws2"], fused["wa2"], fused["b4"], fused["w5"], fused["b5"], fused["w6"])
         + fused["bq"])
    return q[:, 0:1], q[:, 1:2]


if __name__ == "__main__":
    num_inputs, num_actions, hidden_dim = 12, 4, 32

    key = jax.random.PRNGKey(0)
    k_params, k_data = jax.random.split(key)

    params = init_qnetwork_params(k_params, num_inputs, num_actions, hidden_dim)
    fused = pack_qnetwork_params(params, num_inputs, num_actions, hidden_dim)

    ok = True
    for batch in (8, 5):  # 5 exercises the pad-to-tile path
        ks, ka = jax.random.split(jax.random.fold_in(k_data, batch))
        state = jax.random.normal(ks, (batch, num_inputs), jnp.float32)
        action = jax.random.normal(ka, (batch, num_actions), jnp.float32)

        q1, q2 = qnetwork_forward(fused, state, action)
        q1 = jax.block_until_ready(q1)
        q2 = jax.block_until_ready(q2)

        ok &= q1.shape == (batch, 1) and q2.shape == (batch, 1)

        # Tight check vs. a reference that uses the same bf16-operand recipe.
        m1, m2 = _bf16_reference_forward(fused, state, action)
        ok &= bool(jnp.allclose(q1, m1, atol=1e-3, rtol=1e-3))
        ok &= bool(jnp.allclose(q2, m2, atol=1e-3, rtol=1e-3))

        # Loose check vs. the pure-f32 PyTorch-equivalent semantics.
        r1, r2 = _reference_forward(params, state, action)
        ok &= bool(jnp.allclose(q1, r1, atol=5e-2, rtol=5e-2))
        ok &= bool(jnp.allclose(q2, r2, atol=5e-2, rtol=5e-2))

    assert ok
    print("KERNEL_OK")
</pallas_src>

<mosaic_0001>
module attributes {stable_mosaic.version = 11 : i64} {
  func.func @_qnet_kernel(%arg0: i32, %arg1: memref<256x12xf32, #tpu.memory_space<vmem>>, %arg2: memref<256x4xf32, #tpu.memory_space<vmem>>, %arg3: memref<12x32xbf16, #tpu.memory_space<vmem>>, %arg4: memref<4x32xbf16, #tpu.memory_space<vmem>>, %arg5: memref<1x32xf32, #tpu.memory_space<vmem>>, %arg6: memref<32x32xbf16, #tpu.memory_space<vmem>>, %arg7: memref<1x32xf32, #tpu.memory_space<vmem>>, %arg8: memref<32x2xbf16, #tpu.memory_space<vmem>>, %arg9: memref<12x32xbf16, #tpu.memory_space<vmem>>, %arg10: memref<4x32xbf16, #tpu.memory_space<vmem>>, %arg11: memref<1x32xf32, #tpu.memory_space<vmem>>, %arg12: memref<32x32xbf16, #tpu.memory_space<vmem>>, %arg13: memref<1x32xf32, #tpu.memory_space<vmem>>, %arg14: memref<32x2xbf16, #tpu.memory_space<vmem>>, %arg15: memref<1x2xf32, #tpu.memory_space<vmem>>, %arg16: memref<256x2xf32, #tpu.memory_space<vmem>>) attributes {dimension_semantics = [#tpu.dimension_semantics<parallel>], iteration_bounds = array<i64: 1>, scalar_prefetch = 0 : i64, scratch_operands = 0 : i64, tpu.core_type = #tpu.core_type<tc>, window_params = [{transform_indices = @transform_0, window_bounds = array<i64: 256, 12>}, {transform_indices = @transform_1, window_bounds = array<i64: 256, 4>}, {pipeline_mode = #tpu.pipeline_mode<synchronous>, transform_indices = @transform_2, window_bounds = array<i64: 12, 32>}, {pipeline_mode = #tpu.pipeline_mode<synchronous>, transform_indices = @transform_3, window_bounds = array<i64: 4, 32>}, {pipeline_mode = #tpu.pipeline_mode<synchronous>, transform_indices = @transform_4, window_bounds = array<i64: 1, 32>}, {pipeline_mode = #tpu.pipeline_mode<synchronous>, transform_indices = @transform_5, window_bounds = array<i64: 32, 32>}, {pipeline_mode = #tpu.pipeline_mode<synchronous>, transform_indices = @transform_6, window_bounds = array<i64: 1, 32>}, {pipeline_mode = #tpu.pipeline_mode<synchronous>, transform_indices = @transform_7, window_bounds = array<i64: 32, 2>}, {pipeline_mode = #tpu.pipeline_mode<synchronous>, transform_indices = @transform_8, window_bounds = array<i64: 12, 32>}, {pipeline_mode = #tpu.pipeline_mode<synchronous>, transform_indices = @transform_9, window_bounds = array<i64: 4, 32>}, {pipeline_mode = #tpu.pipeline_mode<synchronous>, transform_indices = @transform_10, window_bounds = array<i64: 1, 32>}, {pipeline_mode = #tpu.pipeline_mode<synchronous>, transform_indices = @transform_11, window_bounds = array<i64: 32, 32>}, {pipeline_mode = #tpu.pipeline_mode<synchronous>, transform_indices = @transform_12, window_bounds = array<i64: 1, 32>}, {pipeline_mode = #tpu.pipeline_mode<synchronous>, transform_indices = @transform_13, window_bounds = array<i64: 32, 2>}, {pipeline_mode = #tpu.pipeline_mode<synchronous>, transform_indices = @transform_14, window_bounds = array<i64: 1, 2>}, {transform_indices = @transform_15, window_bounds = array<i64: 256, 2>}]} {
    %c0 = arith.constant 0 : index
    %c0_0 = arith.constant 0 : index
    %0 = vector.load %arg1[%c0, %c0_0] : memref<256x12xf32, #tpu.memory_space<vmem>>, vector<256x12xf32>
    %1 = arith.truncf %0 : vector<256x12xf32> to vector<256x12xbf16>
    %c0_1 = arith.constant 0 : index
    %c0_2 = arith.constant 0 : index
    %2 = vector.load %arg2[%c0_1, %c0_2] : memref<256x4xf32, #tpu.memory_space<vmem>>, vector<256x4xf32>
    %3 = arith.truncf %2 : vector<256x4xf32> to vector<256x4xbf16>
    %c0_3 = arith.constant 0 : index
    %c0_4 = arith.constant 0 : index
    %4 = vector.load %arg3[%c0_3, %c0_4] : memref<12x32xbf16, #tpu.memory_space<vmem>>, vector<12x32xbf16>
    %cst = arith.constant dense<0.000000e+00> : vector<256x32xf32>
    %5 = tpu.matmul %1, %4, %cst {dimension_numbers = #tpu.dot_dimension_numbers<[1], [0], [0], [1], [0, 0, 1, 1], [], []>} : vector<256x12xbf16>, vector<12x32xbf16>, vector<256x32xf32> -> vector<256x32xf32>
    %c0_5 = arith.constant 0 : index
    %c0_6 = arith.constant 0 : index
    %6 = vector.load %arg4[%c0_5, %c0_6] : memref<4x32xbf16, #tpu.memory_space<vmem>>, vector<4x32xbf16>
    %cst_7 = arith.constant dense<0.000000e+00> : vector<256x32xf32>
    %7 = tpu.matmul %3, %6, %cst_7 {dimension_numbers = #tpu.dot_dimension_numbers<[1], [0], [0], [1], [0, 0, 1, 1], [], []>} : vector<256x4xbf16>, vector<4x32xbf16>, vector<256x32xf32> -> vector<256x32xf32>
    %8 = arith.addf %5, %7 : vector<256x32xf32>
    %c0_8 = arith.constant 0 : index
    %c0_9 = arith.constant 0 : index
    %9 = vector.load %arg5[%c0_8, %c0_9] : memref<1x32xf32, #tpu.memory_space<vmem>>, vector<1x32xf32>
    %10 = vector.broadcast %9 : vector<1x32xf32> to vector<256x32xf32>
    %11 = arith.addf %8, %10 : vector<256x32xf32>
    %cst_10 = arith.constant 0.000000e+00 : f32
    %12 = vector.broadcast %cst_10 : f32 to vector<256x32xf32>
    %13 = arith.maximumf %11, %12 : vector<256x32xf32>
    %14 = arith.truncf %13 : vector<256x32xf32> to vector<256x32xbf16>
    %c0_11 = arith.constant 0 : index
    %c0_12 = arith.constant 0 : index
    %15 = vector.load %arg6[%c0_11, %c0_12] : memref<32x32xbf16, #tpu.memory_space<vmem>>, vector<32x32xbf16>
    %cst_13 = arith.constant dense<0.000000e+00> : vector<256x32xf32>
    %16 = tpu.matmul %14, %15, %cst_13 {dimension_numbers = #tpu.dot_dimension_numbers<[1], [0], [0], [1], [0, 0, 1, 1], [], []>} : vector<256x32xbf16>, vector<32x32xbf16>, vector<256x32xf32> -> vector<256x32xf32>
    %c0_14 = arith.constant 0 : index
    %c0_15 = arith.constant 0 : index
    %17 = vector.load %arg7[%c0_14, %c0_15] : memref<1x32xf32, #tpu.memory_space<vmem>>, vector<1x32xf32>
    %18 = vector.broadcast %17 : vector<1x32xf32> to vector<256x32xf32>
    %19 = arith.addf %16, %18 : vector<256x32xf32>
    %cst_16 = arith.constant 0.000000e+00 : f32
    %20 = vector.broadcast %cst_16 : f32 to vector<256x32xf32>
    %21 = arith.maximumf %19, %20 : vector<256x32xf32>
    %22 = arith.truncf %21 : vector<256x32xf32> to vector<256x32xbf16>
    %c0_17 = arith.constant 0 : index
    %c0_18 = arith.constant 0 : index
    %23 = vector.load %arg8[%c0_17, %c0_18] : memref<32x2xbf16, #tpu.memory_space<vmem>>, vector<32x2xbf16>
    %cst_19 = arith.constant dense<0.000000e+00> : vector<256x2xf32>
    %24 = tpu.matmul %22, %23, %cst_19 {dimension_numbers = #tpu.dot_dimension_numbers<[1], [0], [0], [1], [0, 0, 1, 1], [], []>} : vector<256x32xbf16>, vector<32x2xbf16>, vector<256x2xf32> -> vector<256x2xf32>
    %c0_20 = arith.constant 0 : index
    %c0_21 = arith.constant 0 : index
    %25 = vector.load %arg9[%c0_20, %c0_21] : memref<12x32xbf16, #tpu.memory_space<vmem>>, vector<12x32xbf16>
    %cst_22 = arith.constant dense<0.000000e+00> : vector<256x32xf32>
    %26 = tpu.matmul %1, %25, %cst_22 {dimension_numbers = #tpu.dot_dimension_numbers<[1], [0], [0], [1], [0, 0, 1, 1], [], []>} : vector<256x12xbf16>, vector<12x32xbf16>, vector<256x32xf32> -> vector<256x32xf32>
    %c0_23 = arith.constant 0 : index
    %c0_24 = arith.constant 0 : index
    %27 = vector.load %arg10[%c0_23, %c0_24] : memref<4x32xbf16, #tpu.memory_space<vmem>>, vector<4x32xbf16>
    %cst_25 = arith.constant dense<0.000000e+00> : vector<256x32xf32>
    %28 = tpu.matmul %3, %27, %cst_25 {dimension_numbers = #tpu.dot_dimension_numbers<[1], [0], [0], [1], [0, 0, 1, 1], [], []>} : vector<256x4xbf16>, vector<4x32xbf16>, vector<256x32xf32> -> vector<256x32xf32>
    %29 = arith.addf %26, %28 : vector<256x32xf32>
    %c0_26 = arith.constant 0 : index
    %c0_27 = arith.constant 0 : index
    %30 = vector.load %arg11[%c0_26, %c0_27] : memref<1x32xf32, #tpu.memory_space<vmem>>, vector<1x32xf32>
    %31 = vector.broadcast %30 : vector<1x32xf32> to vector<256x32xf32>
    %32 = arith.addf %29, %31 : vector<256x32xf32>
    %cst_28 = arith.constant 0.000000e+00 : f32
    %33 = vector.broadcast %cst_28 : f32 to vector<256x32xf32>
    %34 = arith.maximumf %32, %33 : vector<256x32xf32>
    %35 = arith.truncf %34 : vector<256x32xf32> to vector<256x32xbf16>
    %c0_29 = arith.constant 0 : index
    %c0_30 = arith.constant 0 : index
    %36 = vector.load %arg12[%c0_29, %c0_30] : memref<32x32xbf16, #tpu.memory_space<vmem>>, vector<32x32xbf16>
    %cst_31 = arith.constant dense<0.000000e+00> : vector<256x32xf32>
    %37 = tpu.matmul %35, %36, %cst_31 {dimension_numbers = #tpu.dot_dimension_numbers<[1], [0], [0], [1], [0, 0, 1, 1], [], []>} : vector<256x32xbf16>, vector<32x32xbf16>, vector<256x32xf32> -> vector<256x32xf32>
    %c0_32 = arith.constant 0 : index
    %c0_33 = arith.constant 0 : index
    %38 = vector.load %arg13[%c0_32, %c0_33] : memref<1x32xf32, #tpu.memory_space<vmem>>, vector<1x32xf32>
    %39 = vector.broadcast %38 : vector<1x32xf32> to vector<256x32xf32>
    %40 = arith.addf %37, %39 : vector<256x32xf32>
    %cst_34 = arith.constant 0.000000e+00 : f32
    %41 = vector.broadcast %cst_34 : f32 to vector<256x32xf32>
    %42 = arith.maximumf %40, %41 : vector<256x32xf32>
    %43 = arith.truncf %42 : vector<256x32xf32> to vector<256x32xbf16>
    %c0_35 = arith.constant 0 : index
    %c0_36 = arith.constant 0 : index
    %44 = vector.load %arg14[%c0_35, %c0_36] : memref<32x2xbf16, #tpu.memory_space<vmem>>, vector<32x2xbf16>
    %cst_37 = arith.constant dense<0.000000e+00> : vector<256x2xf32>
    %45 = tpu.matmul %43, %44, %cst_37 {dimension_numbers = #tpu.dot_dimension_numbers<[1], [0], [0], [1], [0, 0, 1, 1], [], []>} : vector<256x32xbf16>, vector<32x2xbf16>, vector<256x2xf32> -> vector<256x2xf32>
    %46 = arith.addf %24, %45 : vector<256x2xf32>
    %c0_38 = arith.constant 0 : index
    %c0_39 = arith.constant 0 : index
    %47 = vector.load %arg15[%c0_38, %c0_39] : memref<1x2xf32, #tpu.memory_space<vmem>>, vector<1x2xf32>
    %48 = vector.broadcast %47 : vector<1x2xf32> to vector<256x2xf32>
    %49 = arith.addf %46, %48 : vector<256x2xf32>
    %c0_40 = arith.constant 0 : index
    %c0_41 = arith.constant 0 : index
    %50 = vector.load %arg16[%c0_40, %c0_41] : memref<256x2xf32, #tpu.memory_space<vmem>>, vector<256x2xf32>
    tpu.vector_store %arg16[%c0_40, %c0_41], %49 {strides = array<i32>} : memref<256x2xf32, #tpu.memory_space<vmem>>, vector<256x2xf32>,
    return
  }
  func.func @transform_0(%arg0: i32) -> (i32, i32) {
    %c0_i32 = arith.constant 0 : i32
    %c0_i32_0 = arith.constant 0 : i32
    return %arg0, %c0_i32 : i32, i32
  }
  func.func @transform_1(%arg0: i32) -> (i32, i32) {
    %c0_i32 = arith.constant 0 : i32
    %c0_i32_0 = arith.constant 0 : i32
    return %arg0, %c0_i32 : i32, i32
  }
  func.func @transform_2(%arg0: i32) -> (i32, i32) {
    %c0_i32 = arith.constant 0 : i32
    %c0_i32_0 = arith.constant 0 : i32
    %c0_i32_1 = arith.constant 0 : i32
    return %c0_i32, %c0_i32_0 : i32, i32
  }
  func.func @transform_3(%arg0: i32) -> (i32, i32) {
    %c0_i32 = arith.constant 0 : i32
    %c0_i32_0 = arith.constant 0 : i32
    %c0_i32_1 = arith.constant 0 : i32
    return %c0_i32, %c0_i32_0 : i32, i32
  }
  func.func @transform_4(%arg0: i32) -> (i32, i32) {
    %c0_i32 = arith.constant 0 : i32
    %c0_i32_0 = arith.constant 0 : i32
    %c0_i32_1 = arith.constant 0 : i32
    return %c0_i32, %c0_i32_0 : i32, i32
  }
  func.func @transform_5(%arg0: i32) -> (i32, i32) {
    %c0_i32 = arith.constant 0 : i32
    %c0_i32_0 = arith.constant 0 : i32
    %c0_i32_1 = arith.constant 0 : i32
    return %c0_i32, %c0_i32_0 : i32, i32
  }
  func.func @transform_6(%arg0: i32) -> (i32, i32) {
    %c0_i32 = arith.constant 0 : i32
    %c0_i32_0 = arith.constant 0 : i32
    %c0_i32_1 = arith.constant 0 : i32
    return %c0_i32, %c0_i32_0 : i32, i32
  }
  func.func @transform_7(%arg0: i32) -> (i32, i32) {
    %c0_i32 = arith.constant 0 : i32
    %c0_i32_0 = arith.constant 0 : i32
    %c0_i32_1 = arith.constant 0 : i32
    return %c0_i32, %c0_i32_0 : i32, i32
  }
  func.func @transform_8(%arg0: i32) -> (i32, i32) {
    %c0_i32 = arith.constant 0 : i32
    %c0_i32_0 = arith.constant 0 : i32
    %c0_i32_1 = arith.constant 0 : i32
    return %c0_i32, %c0_i32_0 : i32, i32
  }
  func.func @transform_9(%arg0: i32) -> (i32, i32) {
    %c0_i32 = arith.constant 0 : i32
    %c0_i32_0 = arith.constant 0 : i32
    %c0_i32_1 = arith.constant 0 : i32
    return %c0_i32, %c0_i32_0 : i32, i32
  }
  func.func @transform_10(%arg0: i32) -> (i32, i32) {
    %c0_i32 = arith.constant 0 : i32
    %c0_i32_0 = arith.constant 0 : i32
    %c0_i32_1 = arith.constant 0 : i32
    return %c0_i32, %c0_i32_0 : i32, i32
  }
  func.func @transform_11(%arg0: i32) -> (i32, i32) {
    %c0_i32 = arith.constant 0 : i32
    %c0_i32_0 = arith.constant 0 : i32
    %c0_i32_1 = arith.constant 0 : i32
    return %c0_i32, %c0_i32_0 : i32, i32
  }
  func.func @transform_12(%arg0: i32) -> (i32, i32) {
    %c0_i32 = arith.constant 0 : i32
    %c0_i32_0 = arith.constant 0 : i32
    %c0_i32_1 = arith.constant 0 : i32
    return %c0_i32, %c0_i32_0 : i32, i32
  }
  func.func @transform_13(%arg0: i32) -> (i32, i32) {
    %c0_i32 = arith.constant 0 : i32
    %c0_i32_0 = arith.constant 0 : i32
    %c0_i32_1 = arith.constant 0 : i32
    return %c0_i32, %c0_i32_0 : i32, i32
  }
  func.func @transform_14(%arg0: i32) -> (i32, i32) {
    %c0_i32 = arith.constant 0 : i32
    %c0_i32_0 = arith.constant 0 : i32
    %c0_i32_1 = arith.constant 0 : i32
    return %c0_i32, %c0_i32_0 : i32, i32
  }
  func.func @transform_15(%arg0: i32) -> (i32, i32) {
    %c0_i32 = arith.constant 0 : i32
    %c0_i32_0 = arith.constant 0 : i32
    return %arg0, %c0_i32 : i32, i32
  }
}

</mosaic_0001>

<llo_original>
// kernel: tpu_custom_call.1
$region0: #{tpu_custom_call.1}
  #allocation0 [shape = 'u32[]', space=smem, size = 0x4, offset = 0x4, fixed_abs, tag = 'smem constant byte address 0x4 - core index']
  #allocation1 [shape = 'u32[144,128]{1,0:T(1,128)}', space=vmem, size = 0x12000, scoped, tag = 'internal scratch']
  %s0 = inlined_call_operand.vmem [shape: f32[256,12], index: 0, kind: input, shape index: {}]
  %s1 = inlined_call_operand.vmem [shape: f32[256,4], index: 1, kind: input, shape index: {}]
  %s2 = inlined_call_operand.vmem [shape: bf16[12,32], index: 2, kind: input, shape index: {}]
  %s3 = inlined_call_operand.vmem [shape: bf16[4,32], index: 3, kind: input, shape index: {}]
  %s4 = inlined_call_operand.vmem [shape: f32[1,32], index: 4, kind: input, shape index: {}]
  %s5 = inlined_call_operand.vmem [shape: bf16[32,32], index: 5, kind: input, shape index: {}]
  %s6 = inlined_call_operand.vmem [shape: f32[1,32], index: 6, kind: input, shape index: {}]
  %s7 = inlined_call_operand.vmem [shape: bf16[32,2], index: 7, kind: input, shape index: {}]
  %s8 = inlined_call_operand.vmem [shape: bf16[12,32], index: 8, kind: input, shape index: {}]
  %s9 = inlined_call_operand.vmem [shape: bf16[4,32], index: 9, kind: input, shape index: {}]
  %s10 = inlined_call_operand.vmem [shape: f32[1,32], index: 10, kind: input, shape index: {}]
  %s11 = inlined_call_operand.vmem [shape: bf16[32,32], index: 11, kind: input, shape index: {}]
  %s12 = inlined_call_operand.vmem [shape: f32[1,32], index: 12, kind: input, shape index: {}]
  %s13 = inlined_call_operand.vmem [shape: bf16[32,2], index: 13, kind: input, shape index: {}]
  %s14 = inlined_call_operand.vmem [shape: f32[1,2], index: 14, kind: input, shape index: {}]
  %s15 = inlined_call_operand.vmem [shape: f32[256,2], index: 15, kind: output, shape index: {}]
  %s16 = sld [smem:[#allocation0]]
  $region70: #{tpu_custom_call.1} parent=0
    _
  %s18 = ssub.s32 1, %s16
  %s19 = scalar_select 0, %s18, %s16
  // Predicated region
  $region2: #{tpu_custom_call.1} parent=0 // pred_check
    _
  $region3: #{tpu_custom_call.1} parent=0 // pred_check_branch
    %21 = sbr.rel (0) target = $region5
  $region4: #{tpu_custom_call.1} parent=0 // pred_region
    _
  $region5: #{tpu_custom_call.1} parent=0 // pred_fallthru
    _
  // Predicated region
  $region6: #{tpu_custom_call.1} parent=0 // pred_check
    _
  $region7: #{tpu_custom_call.1} parent=0 // pred_check_branch
    %23 = sbr.rel (0) target = $region9
  $region8: #{tpu_custom_call.1} parent=0 // pred_region
    _
  $region9: #{tpu_custom_call.1} parent=0 // pred_fallthru
    _
  // Predicated region
  $region10: #{tpu_custom_call.1} parent=0 // pred_check
    _
  $region11: #{tpu_custom_call.1} parent=0 // pred_check_branch
    %25 = sbr.rel (0) target = $region13
  $region12: #{tpu_custom_call.1} parent=0 // pred_region
    _
  $region13: #{tpu_custom_call.1} parent=0 // pred_fallthru
    _
  // Predicated region
  $region14: #{tpu_custom_call.1} parent=0 // pred_check
    _
  $region15: #{tpu_custom_call.1} parent=0 // pred_check_branch
    %27 = sbr.rel (0) target = $region17
  $region16: #{tpu_custom_call.1} parent=0 // pred_region
    _
  $region17: #{tpu_custom_call.1} parent=0 // pred_fallthru
    _
  // Predicated region
  $region18: #{tpu_custom_call.1} parent=0 // pred_check
    _
  $region19: #{tpu_custom_call.1} parent=0 // pred_check_branch
    %29 = sbr.rel (0) target = $region21
  $region20: #{tpu_custom_call.1} parent=0 // pred_region
    _
  $region21: #{tpu_custom_call.1} parent=0 // pred_fallthru
    _
  // Predicated region
  $region22: #{tpu_custom_call.1} parent=0 // pred_check
    _
  $region23: #{tpu_custom_call.1} parent=0 // pred_check_branch
    %31 = sbr.rel (0) target = $region25
  $region24: #{tpu_custom_call.1} parent=0 // pred_region
    _
  $region25: #{tpu_custom_call.1} parent=0 // pred_fallthru
    _
  // Predicated region
  $region26: #{tpu_custom_call.1} parent=0 // pred_check
    _
  $region27: #{tpu_custom_call.1} parent=0 // pred_check_branch
    %33 = sbr.rel (0) target = $region29
  $region28: #{tpu_custom_call.1} parent=0 // pred_region
    _
  $region29: #{tpu_custom_call.1} parent=0 // pred_fallthru
    _
  // Predicated region
  $region30: #{tpu_custom_call.1} parent=0 // pred_check
    _
  $region31: #{tpu_custom_call.1} parent=0 // pred_check_branch
    %35 = sbr.rel (0) target = $region33
  $region32: #{tpu_custom_call.1} parent=0 // pred_region
    _
  $region33: #{tpu_custom_call.1} parent=0 // pred_fallthru
    _
  // Predicated region
  $region34: #{tpu_custom_call.1} parent=0 // pred_check
    _
  $region35: #{tpu_custom_call.1} parent=0 // pred_check_branch
    %37 = sbr.rel (0) target = $region37
  $region36: #{tpu_custom_call.1} parent=0 // pred_region
    _
  $region37: #{tpu_custom_call.1} parent=0 // pred_fallthru
    _
  // Predicated region
  $region38: #{tpu_custom_call.1} parent=0 // pred_check
    _
  $region39: #{tpu_custom_call.1} parent=0 // pred_check_branch
    %39 = sbr.rel (0) target = $region41
  $region40: #{tpu_custom_call.1} parent=0 // pred_region
    _
  $region41: #{tpu_custom_call.1} parent=0 // pred_fallthru
    _
  // Predicated region
  $region42: #{tpu_custom_call.1} parent=0 // pred_check
    _
  $region43: #{tpu_custom_call.1} parent=0 // pred_check_branch
    %41 = sbr.rel (0) target = $region45
  $region44: #{tpu_custom_call.1} parent=0 // pred_region
    _
  $region45: #{tpu_custom_call.1} parent=0 // pred_fallthru
    _
  // Predicated region
  $region46: #{tpu_custom_call.1} parent=0 // pred_check
    _
  $region47: #{tpu_custom_call.1} parent=0 // pred_check_branch
    %43 = sbr.rel (0) target = $region49
  $region48: #{tpu_custom_call.1} parent=0 // pred_region
    _
  $region49: #{tpu_custom_call.1} parent=0 // pred_fallthru
    _
  // Predicated region
  $region50: #{tpu_custom_call.1} parent=0 // pred_check
    _
  $region51: #{tpu_custom_call.1} parent=0 // pred_check_branch
    %45 = sbr.rel (0) target = $region53
  $region52: #{tpu_custom_call.1} parent=0 // pred_region
    _
  $region53: #{tpu_custom_call.1} parent=0 // pred_fallthru
    _
  // Predicated region
  $region54: #{tpu_custom_call.1} parent=0 // pred_check
    _
  $region55: #{tpu_custom_call.1} parent=0 // pred_check_branch
    %47 = sbr.rel (0) target = $region57
  $region56: #{tpu_custom_call.1} parent=0 // pred_region
    _
  $region57: #{tpu_custom_call.1} parent=0 // pred_fallthru
    _
  // Predicated region
  $region58: #{tpu_custom_call.1} parent=0 // pred_check
    _
  $region59: #{tpu_custom_call.1} parent=0 // pred_check_branch
    %49 = sbr.rel (0) target = $region61
  $region60: #{tpu_custom_call.1} parent=0 // pred_region
    _
  $region61: #{tpu_custom_call.1} parent=0 // pred_fallthru
    _
  %v51 = vld [vmem:[%s0] sm:$0xff]
  %v52 = vld [vmem:[%s0 + $0x8] sm:$0xff]
  %v53 = vld [vmem:[%s0 + $0x10] sm:$0xff]
  %v54 = vld [vmem:[%s0 + $0x18] sm:$0xff]
  %v55 = vld [vmem:[%s0 + $0x20] sm:$0xff]
  %v56 = vld [vmem:[%s0 + $0x28] sm:$0xff]
  %v57 = vld [vmem:[%s0 + $0x30] sm:$0xff]
  %v58 = vld [vmem:[%s0 + $0x38] sm:$0xff]
  %v59 = vld [vmem:[%s0 + $0x40] sm:$0xff]
  %v60 = vld [vmem:[%s0 + $0x48] sm:$0xff]
  %v61 = vld [vmem:[%s0 + $0x50] sm:$0xff]
  %v62 = vld [vmem:[%s0 + $0x58] sm:$0xff]
  %v63 = vld [vmem:[%s0 + $0x60] sm:$0xff]
  %v64 = vld [vmem:[%s0 + $0x68] sm:$0xff]
  %v65 = vld [vmem:[%s0 + $0x70] sm:$0xff]
  %v66 = vld [vmem:[%s0 + $0x78] sm:$0xff]
  %v67 = vld [vmem:[%s0 + $0x80] sm:$0xff]
  %v68 = vld [vmem:[%s0 + $0x88] sm:$0xff]
  %v69 = vld [vmem:[%s0 + $0x90] sm:$0xff]
  %v70 = vld [vmem:[%s0 + $0x98] sm:$0xff]
  %v71 = vld [vmem:[%s0 + $0xa0] sm:$0xff]
  %v72 = vld [vmem:[%s0 + $0xa8] sm:$0xff]
  %v73 = vld [vmem:[%s0 + $0xb0] sm:$0xff]
  %v74 = vld [vmem:[%s0 + $0xb8] sm:$0xff]
  %v75 = vld [vmem:[%s0 + $0xc0] sm:$0xff]
  %v76 = vld [vmem:[%s0 + $0xc8] sm:$0xff]
  %v77 = vld [vmem:[%s0 + $0xd0] sm:$0xff]
  %v78 = vld [vmem:[%s0 + $0xd8] sm:$0xff]
  %v79 = vld [vmem:[%s0 + $0xe0] sm:$0xff]
  %v80 = vld [vmem:[%s0 + $0xe8] sm:$0xff]
  %v81 = vld [vmem:[%s0 + $0xf0] sm:$0xff]
  %v82 = vld [vmem:[%s0 + $0xf8] sm:$0xff]
  %v83 = vpack.c.bf16 %v52, %v51
  %v84 = vpack.c.bf16 %v54, %v53
  %v85 = vpack.c.bf16 %v56, %v55
  %v86 = vpack.c.bf16 %v58, %v57
  %v87 = vpack.c.bf16 %v60, %v59
  %v88 = vpack.c.bf16 %v62, %v61
  %v89 = vpack.c.bf16 %v64, %v63
  %v90 = vpack.c.bf16 %v66, %v65
  %v91 = vpack.c.bf16 %v68, %v67
  %v92 = vpack.c.bf16 %v70, %v69
  %v93 = vpack.c.bf16 %v72, %v71
  %v94 = vpack.c.bf16 %v74, %v73
  %v95 = vpack.c.bf16 %v76, %v75
  %v96 = vpack.c.bf16 %v78, %v77
  %v97 = vpack.c.bf16 %v80, %v79
  %v98 = vpack.c.bf16 %v82, %v81
  %v99 = vld [vmem:[%s1] sm:$0xff]
  %v100 = vld [vmem:[%s1 + $0x8] sm:$0xff]
  %v101 = vld [vmem:[%s1 + $0x10] sm:$0xff]
  %v102 = vld [vmem:[%s1 + $0x18] sm:$0xff]
  %v103 = vld [vmem:[%s1 + $0x20] sm:$0xff]
  %v104 = vld [vmem:[%s1 + $0x28] sm:$0xff]
  %v105 = vld [vmem:[%s1 + $0x30] sm:$0xff]
  %v106 = vld [vmem:[%s1 + $0x38] sm:$0xff]
  %v107 = vld [vmem:[%s1 + $0x40] sm:$0xff]
  %v108 = vld [vmem:[%s1 + $0x48] sm:$0xff]
  %v109 = vld [vmem:[%s1 + $0x50] sm:$0xff]
  %v110 = vld [vmem:[%s1 + $0x58] sm:$0xff]
  %v111 = vld [vmem:[%s1 + $0x60] sm:$0xff]
  %v112 = vld [vmem:[%s1 + $0x68] sm:$0xff]
  %v113 = vld [vmem:[%s1 + $0x70] sm:$0xff]
  %v114 = vld [vmem:[%s1 + $0x78] sm:$0xff]
  %v115 = vld [vmem:[%s1 + $0x80] sm:$0xff]
  %v116 = vld [vmem:[%s1 + $0x88] sm:$0xff]
  %v117 = vld [vmem:[%s1 + $0x90] sm:$0xff]
  %v118 = vld [vmem:[%s1 + $0x98] sm:$0xff]
  %v119 = vld [vmem:[%s1 + $0xa0] sm:$0xff]
  %v120 = vld [vmem:[%s1 + $0xa8] sm:$0xff]
  %v121 = vld [vmem:[%s1 + $0xb0] sm:$0xff]
  %v122 = vld [vmem:[%s1 + $0xb8] sm:$0xff]
  %v123 = vld [vmem:[%s1 + $0xc0] sm:$0xff]
  %v124 = vld [vmem:[%s1 + $0xc8] sm:$0xff]
  %v125 = vld [vmem:[%s1 + $0xd0] sm:$0xff]
  %v126 = vld [vmem:[%s1 + $0xd8] sm:$0xff]
  %v127 = vld [vmem:[%s1 + $0xe0] sm:$0xff]
  %v128 = vld [vmem:[%s1 + $0xe8] sm:$0xff]
  %v129 = vld [vmem:[%s1 + $0xf0] sm:$0xff]
  %v130 = vld [vmem:[%s1 + $0xf8] sm:$0xff]
  %v131 = vpack.c.bf16 %v100, %v99
  %v132 = vpack.c.bf16 %v102, %v101
  %v133 = vpack.c.bf16 %v104, %v103
  %v134 = vpack.c.bf16 %v106, %v105
  %v135 = vpack.c.bf16 %v108, %v107
  %v136 = vpack.c.bf16 %v110, %v109
  %v137 = vpack.c.bf16 %v112, %v111
  %v138 = vpack.c.bf16 %v114, %v113
  %v139 = vpack.c.bf16 %v116, %v115
  %v140 = vpack.c.bf16 %v118, %v117
  %v141 = vpack.c.bf16 %v120, %v119
  %v142 = vpack.c.bf16 %v122, %v121
  %v143 = vpack.c.bf16 %v124, %v123
  %v144 = vpack.c.bf16 %v126, %v125
  %v145 = vpack.c.bf16 %v128, %v127
  %v146 = vpack.c.bf16 %v130, %v129
  %v147 = vld [vmem:[%s2] sm:$0xf]
  %v148 = vld [vmem:[%s2 + $0x4] sm:$0x3]
  %v149 = vld [vmem:[%s3] sm:$0x3]
  %vm150 = vcmask 31744
  %v152 = vsel %vm150, %v131, 0
  %v155 = vsel %vm150, %v132, 0
  %v158 = vsel %vm150, %v133, 0
  %v161 = vsel %vm150, %v134, 0
  %v164 = vsel %vm150, %v135, 0
  %v167 = vsel %vm150, %v136, 0
  %v170 = vsel %vm150, %v137, 0
  %v173 = vsel %vm150, %v138, 0
  %v176 = vsel %vm150, %v139, 0
  %v179 = vsel %vm150, %v140, 0
  %v182 = vsel %vm150, %v141, 0
  %v185 = vsel %vm150, %v142, 0
  %v188 = vsel %vm150, %v143, 0
  %v191 = vsel %vm150, %v144, 0
  %v194 = vsel %vm150, %v145, 0
  %v197 = vsel %vm150, %v146, 0
  %vm199 = vcmask 1041408
  %v201 = vsel %vm199, %v149, 0
  %203 = vmatprep.subr.bf16.mxu0 0
  %204 = vmatpush1.bf16.msra.mxu0 %v201
  %205 = vmatprep.subr.bf16.mxu0 0
  %206 = vmatpush1.bf16.msra.mxu0 0
  %207 = vmatprep.subr.bf16.mxu0 0
  %208 = vmatpush1.bf16.msra.mxu0 0
  %209 = vmatprep.subr.bf16.mxu0 0
  %210 = vmatpush1.bf16.msra.mxu0 0
  %211 = vmatprep.subr.bf16.mxu0 0
  %212 = vmatpush1.bf16.msra.mxu0 0
  %213 = vmatprep.subr.bf16.mxu0 0
  %214 = vmatpush1.bf16.msra.mxu0 0
  %215 = vmatprep.subr.bf16.mxu0 0
  %216 = vmatpush1.bf16.msra.mxu0 0
  %217 = vmatprep.subr.bf16.mxu0 0
  %218 = vmatpush1.bf16.msra.mxu0 0
  %219 = vmatprep.subr.bf16.mxu0 0
  %220 = vmatpush1.bf16.msra.mxu0 0
  %221 = vmatprep.subr.bf16.mxu0 0
  %222 = vmatpush1.bf16.msra.mxu0 0
  %223 = vmatprep.subr.bf16.mxu0 0
  %224 = vmatpush1.bf16.msra.mxu0 0
  %225 = vmatprep.subr.bf16.mxu0 0
  %226 = vmatpush1.bf16.msra.mxu0 0
  %227 = vmatprep.subr.bf16.mxu0 0
  %228 = vmatpush1.bf16.msra.mxu0 0
  %229 = vmatprep.subr.bf16.mxu0 0
  %230 = vmatpush1.bf16.msra.mxu0 0
  %231 = vmatprep.subr.bf16.mxu0 0
  %232 = vmatpush1.bf16.msra.mxu0 0
  %233 = vmatprep.subr.bf16.mxu0 0
  %234 = vmatpush1.bf16.msra.mxu0 0
  %235 = vmatprep.mubr.bf16.mxu0 0
  %236 = vmatmul.mubr.bf16.gmra.mrb[0].mxu0 %v152
  %v237 = vpop.f32.mrb[0].mxu0
  %v238 = vadd.f32 0.0, %v237
  %v239 = vpop.f32.mrb[0].mxu0
  %v240 = vpop.f32.mrb[0].mxu0
  %v241 = vadd.f32 0.0, %v240
  %v242 = vpop.f32.mrb[0].mxu0
  %243 = vmatprep.mubr.bf16.mxu0 0
  %244 = vmatmul.mubr.bf16.gmra.mrb[0].mxu0 %v155
  %v245 = vpop.f32.mrb[0].mxu0
  %v246 = vadd.f32 0.0, %v245
  %v247 = vpop.f32.mrb[0].mxu0
  %v248 = vpop.f32.mrb[0].mxu0
  %v249 = vadd.f32 0.0, %v248
  %v250 = vpop.f32.mrb[0].mxu0
  %251 = vmatprep.mubr.bf16.mxu0 0
  %252 = vmatmul.mubr.bf16.gmra.mrb[0].mxu0 %v158
  %v253 = vpop.f32.mrb[0].mxu0
  %v254 = vadd.f32 0.0, %v253
  %v255 = vpop.f32.mrb[0].mxu0
  %v256 = vpop.f32.mrb[0].mxu0
  %v257 = vadd.f32 0.0, %v256
  %v258 = vpop.f32.mrb[0].mxu0
  %259 = vmatprep.mubr.bf16.mxu0 0
  %260 = vmatmul.mubr.bf16.gmra.mrb[0].mxu0 %v161
  %v261 = vpop.f32.mrb[0].mxu0
  %v262 = vadd.f32 0.0, %v261
  %v263 = vpop.f32.mrb[0].mxu0
  %v264 = vpop.f32.mrb[0].mxu0
  %v265 = vadd.f32 0.0, %v264
  %v266 = vpop.f32.mrb[0].mxu0
  %267 = vmatprep.mubr.bf16.mxu0 0
  %268 = vmatmul.mubr.bf16.gmra.mrb[0].mxu0 %v164
  %v269 = vpop.f32.mrb[0].mxu0
  %v270 = vadd.f32 0.0, %v269
  %v271 = vpop.f32.mrb[0].mxu0
  %v272 = vpop.f32.mrb[0].mxu0
  %v273 = vadd.f32 0.0, %v272
  %v274 = vpop.f32.mrb[0].mxu0
  %275 = vmatprep.mubr.bf16.mxu0 0
  %276 = vmatmul.mubr.bf16.gmra.mrb[0].mxu0 %v167
  %v277 = vpop.f32.mrb[0].mxu0
  %v278 = vadd.f32 0.0, %v277
  %v279 = vpop.f32.mrb[0].mxu0
  %v280 = vpop.f32.mrb[0].mxu0
  %v281 = vadd.f32 0.0, %v280
  %v282 = vpop.f32.mrb[0].mxu0
  %283 = vmatprep.mubr.bf16.mxu0 0
  %284 = vmatmul.mubr.bf16.gmra.mrb[0].mxu0 %v170
  %v285 = vpop.f32.mrb[0].mxu0
  %v286 = vadd.f32 0.0, %v285
  %v287 = vpop.f32.mrb[0].mxu0
  %v288 = vpop.f32.mrb[0].mxu0
  %v289 = vadd.f32 0.0, %v288
  %v290 = vpop.f32.mrb[0].mxu0
  %291 = vmatprep.mubr.bf16.mxu0 0
  %292 = vmatmul.mubr.bf16.gmra.mrb[0].mxu0 %v173
  %v293 = vpop.f32.mrb[0].mxu0
  %v294 = vadd.f32 0.0, %v293
  %v295 = vpop.f32.mrb[0].mxu0
  %v296 = vpop.f32.mrb[0].mxu0
  %v297 = vadd.f32 0.0, %v296
  %v298 = vpop.f32.mrb[0].mxu0
  %299 = vmatprep.mubr.bf16.mxu0 0
  %300 = vmatmul.mubr.bf16.gmra.mrb[0].mxu0 %v176
  %v301 = vpop.f32.mrb[0].mxu0
  %v302 = vadd.f32 0.0, %v301
  %v303 = vpop.f32.mrb[0].mxu0
  %v304 = vpop.f32.mrb[0].mxu0
  %v305 = vadd.f32 0.0, %v304
  %v306 = vpop.f32.mrb[0].mxu0
  %307 = vmatprep.mubr.bf16.mxu0 0
  %308 = vmatmul.mubr.bf16.gmra.mrb[0].mxu0 %v179
  %v309 = vpop.f32.mrb[0].mxu0
  %v310 = vadd.f32 0.0, %v309
  %v311 = vpop.f32.mrb[0].mxu0
  %v312 = vpop.f32.mrb[0].mxu0
  %v313 = vadd.f32 0.0, %v312
  %v314 = vpop.f32.mrb[0].mxu0
  %315 = vmatprep.mubr.bf16.mxu0 0
  %316 = vmatmul.mubr.bf16.gmra.mrb[0].mxu0 %v182
  %v317 = vpop.f32.mrb[0].mxu0
  %v318 = vadd.f32 0.0, %v317
  %v319 = vpop.f32.mrb[0].mxu0
  %v320 = vpop.f32.mrb[0].mxu0
  %v321 = vadd.f32 0.0, %v320
  %v322 = vpop.f32.mrb[0].mxu0
  %323 = vmatprep.mubr.bf16.mxu0 0
  %324 = vmatmul.mubr.bf16.gmra.mrb[0].mxu0 %v185
  %v325 = vpop.f32.mrb[0].mxu0
  %v326 = vadd.f32 0.0, %v325
  %v327 = vpop.f32.mrb[0].mxu0
  %v328 = vpop.f32.mrb[0].mxu0
  %v329 = vadd.f32 0.0, %v328
  %v330 = vpop.f32.mrb[0].mxu0
  %331 = vmatprep.mubr.bf16.mxu0 0
  %332 = vmatmul.mubr.bf16.gmra.mrb[0].mxu0 %v188
  %v333 = vpop.f32.mrb[0].mxu0
  %v334 = vadd.f32 0.0, %v333
  %v335 = vpop.f32.mrb[0].mxu0
  %v336 = vpop.f32.mrb[0].mxu0
  %v337 = vadd.f32 0.0, %v336
  %v338 = vpop.f32.mrb[0].mxu0
  %339 = vmatprep.mubr.bf16.mxu0 0
  %340 = vmatmul.mubr.bf16.gmra.mrb[0].mxu0 %v191
  %v341 = vpop.f32.mrb[0].mxu0
  %v342 = vadd.f32 0.0, %v341
  %v343 = vpop.f32.mrb[0].mxu0
  %v344 = vpop.f32.mrb[0].mxu0
  %v345 = vadd.f32 0.0, %v344
  %v346 = vpop.f32.mrb[0].mxu0
  %347 = vmatprep.mubr.bf16.mxu0 0
  %348 = vmatmul.mubr.bf16.gmra.mrb[0].mxu0 %v194
  %v349 = vpop.f32.mrb[0].mxu0
  %v350 = vadd.f32 0.0, %v349
  %v351 = vpop.f32.mrb[0].mxu0
  %v352 = vpop.f32.mrb[0].mxu0
  %v353 = vadd.f32 0.0, %v352
  %v354 = vpop.f32.mrb[0].mxu0
  %355 = vmatprep.mubr.bf16.mxu0 0
  %356 = vmatmul.mubr.bf16.gmra.mrb[0].mxu0 %v197
  %v357 = vpop.f32.mrb[0].mxu0
  %v358 = vadd.f32 0.0, %v357
  %v359 = vpop.f32.mrb[0].mxu0
  %v360 = vpop.f32.mrb[0].mxu0
  %v361 = vadd.f32 0.0, %v360
  %v362 = vpop.f32.mrb[0].mxu0
  %363 = vdwg.mxu0
  %v366 = vunpack.c.l.b16 %v147
  %v367 = vunpack.c.l.b16 %v148
  %v368 = vpack.c.b16 %v367, %v366
  %vm369 = vcmask 97280
  %v371 = vsel %vm369, %v83, 0
  %v374 = vsel %vm369, %v84, 0
  %v377 = vsel %vm369, %v85, 0
  %v380 = vsel %vm369, %v86, 0
  %v383 = vsel %vm369, %v87, 0
  %v386 = vsel %vm369, %v88, 0
  %v389 = vsel %vm369, %v89, 0
  %v392 = vsel %vm369, %v90, 0
  %v395 = vsel %vm369, %v91, 0
  %v398 = vsel %vm369, %v92, 0
  %v401 = vsel %vm369, %v93, 0
  %v404 = vsel %vm369, %v94, 0
  %v407 = vsel %vm369, %v95, 0
  %v410 = vsel %vm369, %v96, 0
  %v413 = vsel %vm369, %v97, 0
  %v416 = vsel %vm369, %v98, 0
  %vm418 = vcmask 1045504
  %v420 = vsel %vm418, %v368, 0
  %422 = vmatprep.subr.bf16.mxu0 0
  %423 = vmatpush1.bf16.msra.mxu0 %v420
  %424 = vmatprep.subr.bf16.mxu0 0
  %425 = vmatpush1.bf16.msra.mxu0 0
  %426 = vmatprep.subr.bf16.mxu0 0
  %427 = vmatpush1.bf16.msra.mxu0 0
  %428 = vmatprep.subr.bf16.mxu0 0
  %429 = vmatpush1.bf16.msra.mxu0 0
  %430 = vmatprep.subr.bf16.mxu0 0
  %431 = vmatpush1.bf16.msra.mxu0 0
  %432 = vmatprep.subr.bf16.mxu0 0
  %433 = vmatpush1.bf16.msra.mxu0 0
  %434 = vmatprep.subr.bf16.mxu0 0
  %435 = vmatpush1.bf16.msra.mxu0 0
  %436 = vmatprep.subr.bf16.mxu0 0
  %437 = vmatpush1.bf16.msra.mxu0 0
  %438 = vmatprep.subr.bf16.mxu0 0
  %439 = vmatpush1.bf16.msra.mxu0 0
  %440 = vmatprep.subr.bf16.mxu0 0
  %441 = vmatpush1.bf16.msra.mxu0 0
  %442 = vmatprep.subr.bf16.mxu0 0
  %443 = vmatpush1.bf16.msra.mxu0 0
  %444 = vmatprep.subr.bf16.mxu0 0
  %445 = vmatpush1.bf16.msra.mxu0 0
  %446 = vmatprep.subr.bf16.mxu0 0
  %447 = vmatpush1.bf16.msra.mxu0 0
  %448 = vmatprep.subr.bf16.mxu0 0
  %449 = vmatpush1.bf16.msra.mxu0 0
  %450 = vmatprep.subr.bf16.mxu0 0
  %451 = vmatpush1.bf16.msra.mxu0 0
  %452 = vmatprep.subr.bf16.mxu0 0
  %453 = vmatpush1.bf16.msra.mxu0 0
  %454 = vmatprep.mubr.bf16.mxu0 0
  %455 = vmatmul.mubr.bf16.gmra.mrb[0].mxu0 %v371
  %v456 = vpop.f32.mrb[0].mxu0
  %v457 = vadd.f32 %v238, %v456
  %v458 = vpop.f32.mrb[0].mxu0
  %v459 = vpop.f32.mrb[0].mxu0
  %v460 = vadd.f32 %v241, %v459
  %v461 = vpop.f32.mrb[0].mxu0
  %462 = vmatprep.mubr.bf16.mxu0 0
  %463 = vmatmul.mubr.bf16.gmra.mrb[0].mxu0 %v374
  %v464 = vpop.f32.mrb[0].mxu0
  %v465 = vadd.f32 %v246, %v464
  %v466 = vpop.f32.mrb[0].mxu0
  %v467 = vpop.f32.mrb[0].mxu0
  %v468 = vadd.f32 %v249, %v467
  %v469 = vpop.f32.mrb[0].mxu0
  %470 = vmatprep.mubr.bf16.mxu0 0
  %471 = vmatmul.mubr.bf16.gmra.mrb[0].mxu0 %v377
  %v472 = vpop.f32.mrb[0].mxu0
  %v473 = vadd.f32 %v254, %v472
  %v474 = vpop.f32.mrb[0].mxu0
  %v475 = vpop.f32.mrb[0].mxu0
  %v476 = vadd.f32 %v257, %v475
  %v477 = vpop.f32.mrb[0].mxu0
  %478 = vmatprep.mubr.bf16.mxu0 0
  %479 = vmatmul.mubr.bf16.gmra.mrb[0].mxu0 %v380
  %v480 = vpop.f32.mrb[0].mxu0
  %v481 = vadd.f32 %v262, %v480
  %v482 = vpop.f32.mrb[0].mxu0
  %v483 = vpop.f32.mrb[0].mxu0
  %v484 = vadd.f32 %v265, %v483
  %v485 = vpop.f32.mrb[0].mxu0
  %486 = vmatprep.mubr.bf16.mxu0 0
  %487 = vmatmul.mubr.bf16.gmra.mrb[0].mxu0 %v383
  %v488 = vpop.f32.mrb[0].mxu0
  %v489 = vadd.f32 %v270, %v488
  %v490 = vpop.f32.mrb[0].mxu0
  %v491 = vpop.f32.mrb[0].mxu0
  %v492 = vadd.f32 %v273, %v491
  %v493 = vpop.f32.mrb[0].mxu0
  %494 = vmatprep.mubr.bf16.mxu0 0
  %495 = vmatmul.mubr.bf16.gmra.mrb[0].mxu0 %v386
  %v496 = vpop.f32.mrb[0].mxu0
  %v497 = vadd.f32 %v278, %v496
  %v498 = vpop.f32.mrb[0].mxu0
  %v499 = vpop.f32.mrb[0].mxu0
  %v500 = vadd.f32 %v281, %v499
  %v501 = vpop.f32.mrb[0].mxu0
  %502 = vmatprep.mubr.bf16.mxu0 0
  %503 = vmatmul.mubr.bf16.gmra.mrb[0].mxu0 %v389
  %v504 = vpop.f32.mrb[0].mxu0
  %v505 = vadd.f32 %v286, %v504
  %v506 = vpop.f32.mrb[0].mxu0
  %v507 = vpop.f32.mrb[0].mxu0
  %v508 = vadd.f32 %v289, %v507
  %v509 = vpop.f32.mrb[0].mxu0
  %510 = vmatprep.mubr.bf16.mxu0 0
  %511 = vmatmul.mubr.bf16.gmra.mrb[0].mxu0 %v392
  %v512 = vpop.f32.mrb[0].mxu0
  %v513 = vadd.f32 %v294, %v512
  %v514 = vpop.f32.mrb[0].mxu0
  %v515 = vpop.f32.mrb[0].mxu0
  %v516 = vadd.f32 %v297, %v515
  %v517 = vpop.f32.mrb[0].mxu0
  %518 = vmatprep.mubr.bf16.mxu0 0
  %519 = vmatmul.mubr.bf16.gmra.mrb[0].mxu0 %v395
  %v520 = vpop.f32.mrb[0].mxu0
  %v521 = vadd.f32 %v302, %v520
  %v522 = vpop.f32.mrb[0].mxu0
  %v523 = vpop.f32.mrb[0].mxu0
  %v524 = vadd.f32 %v305, %v523
  %v525 = vpop.f32.mrb[0].mxu0
  %526 = vmatprep.mubr.bf16.mxu0 0
  %527 = vmatmul.mubr.bf16.gmra.mrb[0].mxu0 %v398
  %v528 = vpop.f32.mrb[0].mxu0
  %v529 = vadd.f32 %v310, %v528
  %v530 = vpop.f32.mrb[0].mxu0
  %v531 = vpop.f32.mrb[0].mxu0
  %v532 = vadd.f32 %v313, %v531
  %v533 = vpop.f32.mrb[0].mxu0
  %534 = vmatprep.mubr.bf16.mxu0 0
  %535 = vmatmul.mubr.bf16.gmra.mrb[0].mxu0 %v401
  %v536 = vpop.f32.mrb[0].mxu0
  %v537 = vadd.f32 %v318, %v536
  %v538 = vpop.f32.mrb[0].mxu0
  %v539 = vpop.f32.mrb[0].mxu0
  %v540 = vadd.f32 %v321, %v539
  %v541 = vpop.f32.mrb[0].mxu0
  %542 = vmatprep.mubr.bf16.mxu0 0
  %543 = vmatmul.mubr.bf16.gmra.mrb[0].mxu0 %v404
  %v544 = vpop.f32.mrb[0].mxu0
  %v545 = vadd.f32 %v326, %v544
  %v546 = vpop.f32.mrb[0].mxu0
  %v547 = vpop.f32.mrb[0].mxu0
  %v548 = vadd.f32 %v329, %v547
  %v549 = vpop.f32.mrb[0].mxu0
  %550 = vmatprep.mubr.bf16.mxu0 0
  %551 = vmatmul.mubr.bf16.gmra.mrb[0].mxu0 %v407
  %v552 = vpop.f32.mrb[0].mxu0
  %v553 = vadd.f32 %v334, %v552
  %v554 = vpop.f32.mrb[0].mxu0
  %v555 = vpop.f32.mrb[0].mxu0
  %v556 = vadd.f32 %v337, %v555
  %v557 = vpop.f32.mrb[0].mxu0
  %558 = vmatprep.mubr.bf16.mxu0 0
  %559 = vmatmul.mubr.bf16.gmra.mrb[0].mxu0 %v410
  %v560 = vpop.f32.mrb[0].mxu0
  %v561 = vadd.f32 %v342, %v560
  %v562 = vpop.f32.mrb[0].mxu0
  %v563 = vpop.f32.mrb[0].mxu0
  %v564 = vadd.f32 %v345, %v563
  %v565 = vpop.f32.mrb[0].mxu0
  %566 = vmatprep.mubr.bf16.mxu0 0
  %567 = vmatmul.mubr.bf16.gmra.mrb[0].mxu0 %v413
  %v568 = vpop.f32.mrb[0].mxu0
  %v569 = vadd.f32 %v350, %v568
  %v570 = vpop.f32.mrb[0].mxu0
  %v571 = vpop.f32.mrb[0].mxu0
  %v572 = vadd.f32 %v353, %v571
  %v573 = vpop.f32.mrb[0].mxu0
  %574 = vmatprep.mubr.bf16.mxu0 0
  %575 = vmatmul.mubr.bf16.gmra.mrb[0].mxu0 %v416
  %v576 = vpop.f32.mrb[0].mxu0
  %v577 = vadd.f32 %v358, %v576
  %v578 = vpop.f32.mrb[0].mxu0
  %v579 = vpop.f32.mrb[0].mxu0
  %v580 = vadd.f32 %v361, %v579
  %v581 = vpop.f32.mrb[0].mxu0
  %582 = vdwg.mxu0
  %v583 = vld [vmem:[%s4] sm:$0x1]
  %v585 = vlaneseq
  %v586 = vshrl.u32 %v585, 7
  %v587 = vsub.s32 0, %v586
  %v588 = vrot.slane %v583, %v587
  %v590 = vadd.f32 %v457, %v588
  %v591 = vadd.f32 %v460, %v588
  %v592 = vadd.f32 %v465, %v588
  %v593 = vadd.f32 %v468, %v588
  %v594 = vadd.f32 %v473, %v588
  %v595 = vadd.f32 %v476, %v588
  %v596 = vadd.f32 %v481, %v588
  %v597 = vadd.f32 %v484, %v588
  %v598 = vadd.f32 %v489, %v588
  %v599 = vadd.f32 %v492, %v588
  %v600 = vadd.f32 %v497, %v588
  %v601 = vadd.f32 %v500, %v588
  %v602 = vadd.f32 %v505, %v588
  %v603 = vadd.f32 %v508, %v588
  %v604 = vadd.f32 %v513, %v588
  %v605 = vadd.f32 %v516, %v588
  %v606 = vadd.f32 %v521, %v588
  %v607 = vadd.f32 %v524, %v588
  %v608 = vadd.f32 %v529, %v588
  %v609 = vadd.f32 %v532, %v588
  %v610 = vadd.f32 %v537, %v588
  %v611 = vadd.f32 %v540, %v588
  %v612 = vadd.f32 %v545, %v588
  %v613 = vadd.f32 %v548, %v588
  %v614 = vadd.f32 %v553, %v588
  %v615 = vadd.f32 %v556, %v588
  %v616 = vadd.f32 %v561, %v588
  %v617 = vadd.f32 %v564, %v588
  %v618 = vadd.f32 %v569, %v588
  %v619 = vadd.f32 %v572, %v588
  %v620 = vadd.f32 %v577, %v588
  %v621 = vadd.f32 %v580, %v588
  %v622 = vmax.f32 %v590, 0.0
  %v623 = vmax.f32 %v591, 0.0
  %v624 = vmax.f32 %v592, 0.0
  %v625 = vmax.f32 %v593, 0.0
  %v626 = vmax.f32 %v594, 0.0
  %v627 = vmax.f32 %v595, 0.0
  %v628 = vmax.f32 %v596, 0.0
  %v629 = vmax.f32 %v597, 0.0
  %v630 = vmax.f32 %v598, 0.0
  %v631 = vmax.f32 %v599, 0.0
  %v632 = vmax.f32 %v600, 0.0
  %v633 = vmax.f32 %v601, 0.0
  %v634 = vmax.f32 %v602, 0.0
  %v635 = vmax.f32 %v603, 0.0
  %v636 = vmax.f32 %v604, 0.0
  %v637 = vmax.f32 %v605, 0.0
  %v638 = vmax.f32 %v606, 0.0
  %v639 = vmax.f32 %v607, 0.0
  %v640 = vmax.f32 %v608, 0.0
  %v641 = vmax.f32 %v609, 0.0
  %v642 = vmax.f32 %v610, 0.0
  %v643 = vmax.f32 %v611, 0.0
  %v644 = vmax.f32 %v612, 0.0
  %v645 = vmax.f32 %v613, 0.0
  %v646 = vmax.f32 %v614, 0.0
  %v647 = vmax.f32 %v615, 0.0
  %v648 = vmax.f32 %v616, 0.0
  %v649 = vmax.f32 %v617, 0.0
  %v650 = vmax.f32 %v618, 0.0
  %v651 = vmax.f32 %v619, 0.0
  %v652 = vmax.f32 %v620, 0.0
  %v653 = vmax.f32 %v621, 0.0
  %v654 = vpack.c.bf16 %v623, %v622
  %v655 = vpack.c.bf16 %v625, %v624
  %v656 = vpack.c.bf16 %v627, %v626
  %v657 = vpack.c.bf16 %v629, %v628
  %v658 = vpack.c.bf16 %v631, %v630
  %v659 = vpack.c.bf16 %v633, %v632
  %v660 = vpack.c.bf16 %v635, %v634
  %v661 = vpack.c.bf16 %v637, %v636
  %v662 = vpack.c.bf16 %v639, %v638
  %v663 = vpack.c.bf16 %v641, %v640
  %v664 = vpack.c.bf16 %v643, %v642
  %v665 = vpack.c.bf16 %v645, %v644
  %v666 = vpack.c.bf16 %v647, %v646
  %v667 = vpack.c.bf16 %v649, %v648
  %v668 = vpack.c.bf16 %v651, %v650
  %v669 = vpack.c.bf16 %v653, %v652
  %v670 = vld [vmem:[%s5] sm:$0xf]
  %v671 = vld [vmem:[%s5 + $0x4] sm:$0xf]
  %v672 = vld [vmem:[%s5 + $0x8] sm:$0xf]
  %v673 = vld [vmem:[%s5 + $0xc] sm:$0xf]
  %v674 = vld [vmem:[%s6] sm:$0x1]
  %v676 = vlaneseq
  %v677 = vshrl.u32 %v676, 7
  %v678 = vsub.s32 0, %v677
  %v679 = vrot.slane %v674, %v678
  %v685 = vunpack.c.l.b16 %v670
  %v686 = vunpack.c.l.b16 %v671
  %v687 = vunpack.c.l.b16 %v672
  %v688 = vunpack.c.l.b16 %v673
  %v689 = vpack.c.b16 %v686, %v685
  %v690 = vpack.c.b16 %v688, %v687
  %vm693 = vcmask 261120
  %v695 = vsel %vm693, %v654, 0
  %v698 = vsel %vm693, %v655, 0
  %v701 = vsel %vm693, %v656, 0
  %v704 = vsel %vm693, %v657, 0
  %v707 = vsel %vm693, %v658, 0
  %v710 = vsel %vm693, %v659, 0
  %v713 = vsel %vm693, %v660, 0
  %v716 = vsel %vm693, %v661, 0
  %v719 = vsel %vm693, %v662, 0
  %v722 = vsel %vm693, %v663, 0
  %v725 = vsel %vm693, %v664, 0
  %v728 = vsel %vm693, %v665, 0
  %v731 = vsel %vm693, %v666, 0
  %v734 = vsel %vm693, %v667, 0
  %v737 = vsel %vm693, %v668, 0
  %v740 = vsel %vm693, %v669, 0
  %742 = vmatprep.subr.bf16.mxu0 0
  %743 = vmatpush1.bf16.msra.mxu0 %v689
  %744 = vmatprep.subr.bf16.mxu0 0
  %745 = vmatpush1.bf16.msra.mxu0 %v690
  %746 = vmatprep.subr.bf16.mxu0 0
  %747 = vmatpush1.bf16.msra.mxu0 0
  %748 = vmatprep.subr.bf16.mxu0 0
  %749 = vmatpush1.bf16.msra.mxu0 0
  %750 = vmatprep.subr.bf16.mxu0 0
  %751 = vmatpush1.bf16.msra.mxu0 0
  %752 = vmatprep.subr.bf16.mxu0 0
  %753 = vmatpush1.bf16.msra.mxu0 0
  %754 = vmatprep.subr.bf16.mxu0 0
  %755 = vmatpush1.bf16.msra.mxu0 0
  %756 = vmatprep.subr.bf16.mxu0 0
  %757 = vmatpush1.bf16.msra.mxu0 0
  %758 = vmatprep.subr.bf16.mxu0 0
  %759 = vmatpush1.bf16.msra.mxu0 0
  %760 = vmatprep.subr.bf16.mxu0 0
  %761 = vmatpush1.bf16.msra.mxu0 0
  %762 = vmatprep.subr.bf16.mxu0 0
  %763 = vmatpush1.bf16.msra.mxu0 0
  %764 = vmatprep.subr.bf16.mxu0 0
  %765 = vmatpush1.bf16.msra.mxu0 0
  %766 = vmatprep.subr.bf16.mxu0 0
  %767 = vmatpush1.bf16.msra.mxu0 0
  %768 = vmatprep.subr.bf16.mxu0 0
  %769 = vmatpush1.bf16.msra.mxu0 0
  %770 = vmatprep.subr.bf16.mxu0 0
  %771 = vmatpush1.bf16.msra.mxu0 0
  %772 = vmatprep.subr.bf16.mxu0 0
  %773 = vmatpush1.bf16.msra.mxu0 0
  %774 = vmatprep.mubr.bf16.mxu0 0
  %775 = vmatmul.mubr.bf16.gmra.mrb[0].mxu0 %v695
  %v776 = vpop.f32.mrb[0].mxu0
  %v777 = vadd.f32 %v679, %v776
  %v778 = vpop.f32.mrb[0].mxu0
  %v779 = vpop.f32.mrb[0].mxu0
  %v780 = vadd.f32 %v679, %v779
  %v781 = vpop.f32.mrb[0].mxu0
  %782 = vmatprep.mubr.bf16.mxu0 0
  %783 = vmatmul.mubr.bf16.gmra.mrb[0].mxu0 %v698
  %v784 = vpop.f32.mrb[0].mxu0
  %v785 = vadd.f32 %v679, %v784
  %v786 = vpop.f32.mrb[0].mxu0
  %v787 = vpop.f32.mrb[0].mxu0
  %v788 = vadd.f32 %v679, %v787
  %v789 = vpop.f32.mrb[0].mxu0
  %790 = vmatprep.mubr.bf16.mxu0 0
  %791 = vmatmul.mubr.bf16.gmra.mrb[0].mxu0 %v701
  %v792 = vpop.f32.mrb[0].mxu0
  %v793 = vadd.f32 %v679, %v792
  %v794 = vpop.f32.mrb[0].mxu0
  %v795 = vpop.f32.mrb[0].mxu0
  %v796 = vadd.f32 %v679, %v795
  %v797 = vpop.f32.mrb[0].mxu0
  %798 = vmatprep.mubr.bf16.mxu0 0
  %799 = vmatmul.mubr.bf16.gmra.mrb[0].mxu0 %v704
  %v800 = vpop.f32.mrb[0].mxu0
  %v801 = vadd.f32 %v679, %v800
  %v802 = vpop.f32.mrb[0].mxu0
  %v803 = vpop.f32.mrb[0].mxu0
  %v804 = vadd.f32 %v679, %v803
  %v805 = vpop.f32.mrb[0].mxu0
  %806 = vmatprep.mubr.bf16.mxu0 0
  %807 = vmatmul.mubr.bf16.gmra.mrb[0].mxu0 %v707
  %v808 = vpop.f32.mrb[0].mxu0
  %v809 = vadd.f32 %v679, %v808
  %v810 = vpop.f32.mrb[0].mxu0
  %v811 = vpop.f32.mrb[0].mxu0
  %v812 = vadd.f32 %v679, %v811
  %v813 = vpop.f32.mrb[0].mxu0
  %814 = vmatprep.mubr.bf16.mxu0 0
  %815 = vmatmul.mubr.bf16.gmra.mrb[0].mxu0 %v710
  %v816 = vpop.f32.mrb[0].mxu0
  %v817 = vadd.f32 %v679, %v816
  %v818 = vpop.f32.mrb[0].mxu0
  %v819 = vpop.f32.mrb[0].mxu0
  %v820 = vadd.f32 %v679, %v819
  %v821 = vpop.f32.mrb[0].mxu0
  %822 = vmatprep.mubr.bf16.mxu0 0
  %823 = vmatmul.mubr.bf16.gmra.mrb[0].mxu0 %v713
  %v824 = vpop.f32.mrb[0].mxu0
  %v825 = vadd.f32 %v679, %v824
  %v826 = vpop.f32.mrb[0].mxu0
  %v827 = vpop.f32.mrb[0].mxu0
  %v828 = vadd.f32 %v679, %v827
  %v829 = vpop.f32.mrb[0].mxu0
  %830 = vmatprep.mubr.bf16.mxu0 0
  %831 = vmatmul.mubr.bf16.gmra.mrb[0].mxu0 %v716
  %v832 = vpop.f32.mrb[0].mxu0
  %v833 = vadd.f32 %v679, %v832
  %v834 = vpop.f32.mrb[0].mxu0
  %v835 = vpop.f32.mrb[0].mxu0
  %v836 = vadd.f32 %v679, %v835
  %v837 = vpop.f32.mrb[0].mxu0
  %838 = vmatprep.mubr.bf16.mxu0 0
  %839 = vmatmul.mubr.bf16.gmra.mrb[0].mxu0 %v719
  %v840 = vpop.f32.mrb[0].mxu0
  %v841 = vadd.f32 %v679, %v840
  %v842 = vpop.f32.mrb[0].mxu0
  %v843 = vpop.f32.mrb[0].mxu0
  %v844 = vadd.f32 %v679, %v843
  %v845 = vpop.f32.mrb[0].mxu0
  %846 = vmatprep.mubr.bf16.mxu0 0
  %847 = vmatmul.mubr.bf16.gmra.mrb[0].mxu0 %v722
  %v848 = vpop.f32.mrb[0].mxu0
  %v849 = vadd.f32 %v679, %v848
  %v850 = vpop.f32.mrb[0].mxu0
  %v851 = vpop.f32.mrb[0].mxu0
  %v852 = vadd.f32 %v679, %v851
  %v853 = vpop.f32.mrb[0].mxu0
  %854 = vmatprep.mubr.bf16.mxu0 0
  %855 = vmatmul.mubr.bf16.gmra.mrb[0].mxu0 %v725
  %v856 = vpop.f32.mrb[0].mxu0
  %v857 = vadd.f32 %v679, %v856
  %v858 = vpop.f32.mrb[0].mxu0
  %v859 = vpop.f32.mrb[0].mxu0
  %v860 = vadd.f32 %v679, %v859
  %v861 = vpop.f32.mrb[0].mxu0
  %862 = vmatprep.mubr.bf16.mxu0 0
  %863 = vmatmul.mubr.bf16.gmra.mrb[0].mxu0 %v728
  %v864 = vpop.f32.mrb[0].mxu0
  %v865 = vadd.f32 %v679, %v864
  %v866 = vpop.f32.mrb[0].mxu0
  %v867 = vpop.f32.mrb[0].mxu0
  %v868 = vadd.f32 %v679, %v867
  %v869 = vpop.f32.mrb[0].mxu0
  %870 = vmatprep.mubr.bf16.mxu0 0
  %871 = vmatmul.mubr.bf16.gmra.mrb[0].mxu0 %v731
  %v872 = vpop.f32.mrb[0].mxu0
  %v873 = vadd.f32 %v679, %v872
  %v874 = vpop.f32.mrb[0].mxu0
  %v875 = vpop.f32.mrb[0].mxu0
  %v876 = vadd.f32 %v679, %v875
  %v877 = vpop.f32.mrb[0].mxu0
  %878 = vmatprep.mubr.bf16.mxu0 0
  %879 = vmatmul.mubr.bf16.gmra.mrb[0].mxu0 %v734
  %v880 = vpop.f32.mrb[0].mxu0
  %v881 = vadd.f32 %v679, %v880
  %v882 = vpop.f32.mrb[0].mxu0
  %v883 = vpop.f32.mrb[0].mxu0
  %v884 = vadd.f32 %v679, %v883
  %v885 = vpop.f32.mrb[0].mxu0
  %886 = vmatprep.mubr.bf16.mxu0 0
  %887 = vmatmul.mubr.bf16.gmra.mrb[0].mxu0 %v737
  %v888 = vpop.f32.mrb[0].mxu0
  %v889 = vadd.f32 %v679, %v888
  %v890 = vpop.f32.mrb[0].mxu0
  %v891 = vpop.f32.mrb[0].mxu0
  %v892 = vadd.f32 %v679, %v891
  %v893 = vpop.f32.mrb[0].mxu0
  %894 = vmatprep.mubr.bf16.mxu0 0
  %895 = vmatmul.mubr.bf16.gmra.mrb[0].mxu0 %v740
  %v896 = vpop.f32.mrb[0].mxu0
  %v897 = vadd.f32 %v679, %v896
  %v898 = vpop.f32.mrb[0].mxu0
  %v899 = vpop.f32.mrb[0].mxu0
  %v900 = vadd.f32 %v679, %v899
  %v901 = vpop.f32.mrb[0].mxu0
  %902 = vdwg.mxu0
  %v903 = vmax.f32 %v777, 0.0
  %v904 = vmax.f32 %v780, 0.0
  %v905 = vmax.f32 %v785, 0.0
  %v906 = vmax.f32 %v788, 0.0
  %v907 = vmax.f32 %v793, 0.0
  %v908 = vmax.f32 %v796, 0.0
  %v909 = vmax.f32 %v801, 0.0
  %v910 = vmax.f32 %v804, 0.0
  %v911 = vmax.f32 %v809, 0.0
  %v912 = vmax.f32 %v812, 0.0
  %v913 = vmax.f32 %v817, 0.0
  %v914 = vmax.f32 %v820, 0.0
  %v915 = vmax.f32 %v825, 0.0
  %v916 = vmax.f32 %v828, 0.0
  %v917 = vmax.f32 %v833, 0.0
  %v918 = vmax.f32 %v836, 0.0
  %v919 = vmax.f32 %v841, 0.0
  %v920 = vmax.f32 %v844, 0.0
  %v921 = vmax.f32 %v849, 0.0
  %v922 = vmax.f32 %v852, 0.0
  %v923 = vmax.f32 %v857, 0.0
  %v924 = vmax.f32 %v860, 0.0
  %v925 = vmax.f32 %v865, 0.0
  %v926 = vmax.f32 %v868, 0.0
  %v927 = vmax.f32 %v873, 0.0
  %v928 = vmax.f32 %v876, 0.0
  %v929 = vmax.f32 %v881, 0.0
  %v930 = vmax.f32 %v884, 0.0
  %v931 = vmax.f32 %v889, 0.0
  %v932 = vmax.f32 %v892, 0.0
  %v933 = vmax.f32 %v897, 0.0
  %v934 = vmax.f32 %v900, 0.0
  %v935 = vpack.c.bf16 %v904, %v903
  %v936 = vpack.c.bf16 %v906, %v905
  %v937 = vpack.c.bf16 %v908, %v907
  %v938 = vpack.c.bf16 %v910, %v909
  %v939 = vpack.c.bf16 %v912, %v911
  %v940 = vpack.c.bf16 %v914, %v913
  %v941 = vpack.c.bf16 %v916, %v915
  %v942 = vpack.c.bf16 %v918, %v917
  %v943 = vpack.c.bf16 %v920, %v919
  %v944 = vpack.c.bf16 %v922, %v921
  %v945 = vpack.c.bf16 %v924, %v923
  %v946 = vpack.c.bf16 %v926, %v925
  %v947 = vpack.c.bf16 %v928, %v927
  %v948 = vpack.c.bf16 %v930, %v929
  %v949 = vpack.c.bf16 %v932, %v931
  %v950 = vpack.c.bf16 %v934, %v933
  %v951 = vld [vmem:[%s7] sm:$0xf]
  %v952 = vld [vmem:[%s7 + $0x4] sm:$0xf]
  %v953 = vld [vmem:[%s7 + $0x8] sm:$0xf]
  %v954 = vld [vmem:[%s7 + $0xc] sm:$0xf]
  %v955 = vld [vmem:[%s8] sm:$0xf]
  %v956 = vld [vmem:[%s8 + $0x4] sm:$0x3]
  %v957 = vld [vmem:[%s9] sm:$0x3]
  %v959 = vsel %vm199, %v957, 0
  %961 = vmatprep.subr.bf16.mxu0 0
  %962 = vmatpush1.bf16.msra.mxu0 %v959
  %963 = vmatprep.subr.bf16.mxu0 0
  %964 = vmatpush1.bf16.msra.mxu0 0
  %965 = vmatprep.subr.bf16.mxu0 0
  %966 = vmatpush1.bf16.msra.mxu0 0
  %967 = vmatprep.subr.bf16.mxu0 0
  %968 = vmatpush1.bf16.msra.mxu0 0
  %969 = vmatprep.subr.bf16.mxu0 0
  %970 = vmatpush1.bf16.msra.mxu0 0
  %971 = vmatprep.subr.bf16.mxu0 0
  %972 = vmatpush1.bf16.msra.mxu0 0
  %973 = vmatprep.subr.bf16.mxu0 0
  %974 = vmatpush1.bf16.msra.mxu0 0
  %975 = vmatprep.subr.bf16.mxu0 0
  %976 = vmatpush1.bf16.msra.mxu0 0
  %977 = vmatprep.subr.bf16.mxu0 0
  %978 = vmatpush1.bf16.msra.mxu0 0
  %979 = vmatprep.subr.bf16.mxu0 0
  %980 = vmatpush1.bf16.msra.mxu0 0
  %981 = vmatprep.subr.bf16.mxu0 0
  %982 = vmatpush1.bf16.msra.mxu0 0
  %983 = vmatprep.subr.bf16.mxu0 0
  %984 = vmatpush1.bf16.msra.mxu0 0
  %985 = vmatprep.subr.bf16.mxu0 0
  %986 = vmatpush1.bf16.msra.mxu0 0
  %987 = vmatprep.subr.bf16.mxu0 0
  %988 = vmatpush1.bf16.msra.mxu0 0
  %989 = vmatprep.subr.bf16.mxu0 0
  %990 = vmatpush1.bf16.msra.mxu0 0
  %991 = vmatprep.subr.bf16.mxu0 0
  %992 = vmatpush1.bf16.msra.mxu0 0
  %993 = vmatprep.mubr.bf16.mxu0 0
  %994 = vmatmul.mubr.bf16.gmra.mrb[0].mxu0 %v152
  %v995 = vpop.f32.mrb[0].mxu0
  %v996 = vadd.f32 0.0, %v995
  %v997 = vpop.f32.mrb[0].mxu0
  %v998 = vpop.f32.mrb[0].mxu0
  %v999 = vadd.f32 0.0, %v998
  %v1000 = vpop.f32.mrb[0].mxu0
  %1001 = vmatprep.mubr.bf16.mxu0 0
  %1002 = vmatmul.mubr.bf16.gmra.mrb[0].mxu0 %v155
  %v1003 = vpop.f32.mrb[0].mxu0
  %v1004 = vadd.f32 0.0, %v1003
  %v1005 = vpop.f32.mrb[0].mxu0
  %v1006 = vpop.f32.mrb[0].mxu0
  %v1007 = vadd.f32 0.0, %v1006
  %v1008 = vpop.f32.mrb[0].mxu0
  %1009 = vmatprep.mubr.bf16.mxu0 0
  %1010 = vmatmul.mubr.bf16.gmra.mrb[0].mxu0 %v158
  %v1011 = vpop.f32.mrb[0].mxu0
  %v1012 = vadd.f32 0.0, %v1011
  %v1013 = vpop.f32.mrb[0].mxu0
  %v1014 = vpop.f32.mrb[0].mxu0
  %v1015 = vadd.f32 0.0, %v1014
  %v1016 = vpop.f32.mrb[0].mxu0
  %1017 = vmatprep.mubr.bf16.mxu0 0
  %1018 = vmatmul.mubr.bf16.gmra.mrb[0].mxu0 %v161
  %v1019 = vpop.f32.mrb[0].mxu0
  %v1020 = vadd.f32 0.0, %v1019
  %v1021 = vpop.f32.mrb[0].mxu0
  %v1022 = vpop.f32.mrb[0].mxu0
  %v1023 = vadd.f32 0.0, %v1022
  %v1024 = vpop.f32.mrb[0].mxu0
  %1025 = vmatprep.mubr.bf16.mxu0 0
  %1026 = vmatmul.mubr.bf16.gmra.mrb[0].mxu0 %v164
  %v1027 = vpop.f32.mrb[0].mxu0
  %v1028 = vadd.f32 0.0, %v1027
  %v1029 = vpop.f32.mrb[0].mxu0
  %v1030 = vpop.f32.mrb[0].mxu0
  %v1031 = vadd.f32 0.0, %v1030
  %v1032 = vpop.f32.mrb[0].mxu0
  %1033 = vmatprep.mubr.bf16.mxu0 0
  %1034 = vmatmul.mubr.bf16.gmra.mrb[0].mxu0 %v167
  %v1035 = vpop.f32.mrb[0].mxu0
  %v1036 = vadd.f32 0.0, %v1035
  %v1037 = vpop.f32.mrb[0].mxu0
  %v1038 = vpop.f32.mrb[0].mxu0
  %v1039 = vadd.f32 0.0, %v1038
  %v1040 = vpop.f32.mrb[0].mxu0
  %1041 = vmatprep.mubr.bf16.mxu0 0
  %1042 = vmatmul.mubr.bf16.gmra.mrb[0].mxu0 %v170
  %v1043 = vpop.f32.mrb[0].mxu0
  %v1044 = vadd.f32 0.0, %v1043
  %v1045 = vpop.f32.mrb[0].mxu0
  %v1046 = vpop.f32.mrb[0].mxu0
  %v1047 = vadd.f32 0.0, %v1046
  %v1048 = vpop.f32.mrb[0].mxu0
  %1049 = vmatprep.mubr.bf16.mxu0 0
  %1050 = vmatmul.mubr.bf16.gmra.mrb[0].mxu0 %v173
  %v1051 = vpop.f32.mrb[0].mxu0
  %v1052 = vadd.f32 0.0, %v1051
  %v1053 = vpop.f32.mrb[0].mxu0
  %v1054 = vpop.f32.mrb[0].mxu0
  %v1055 = vadd.f32 0.0, %v1054
  %v1056 = vpop.f32.mrb[0].mxu0
  %1057 = vmatprep.mubr.bf16.mxu0 0
  %1058 = vmatmul.mubr.bf16.gmra.mrb[0].mxu0 %v176
  %v1059 = vpop.f32.mrb[0].mxu0
  %v1060 = vadd.f32 0.0, %v1059
  %v1061 = vpop.f32.mrb[0].mxu0
  %v1062 = vpop.f32.mrb[0].mxu0
  %v1063 = vadd.f32 0.0, %v1062
  %v1064 = vpop.f32.mrb[0].mxu0
  %1065 = vmatprep.mubr.bf16.mxu0 0
  %1066 = vmatmul.mubr.bf16.gmra.mrb[0].mxu0 %v179
  %v1067 = vpop.f32.mrb[0].mxu0
  %v1068 = vadd.f32 0.0, %v1067
  %v1069 = vpop.f32.mrb[0].mxu0
  %v1070 = vpop.f32.mrb[0].mxu0
  %v1071 = vadd.f32 0.0, %v1070
  %v1072 = vpop.f32.mrb[0].mxu0
  %1073 = vmatprep.mubr.bf16.mxu0 0
  %1074 = vmatmul.mubr.bf16.gmra.mrb[0].mxu0 %v182
  %v1075 = vpop.f32.mrb[0].mxu0
  %v1076 = vadd.f32 0.0, %v1075
  %v1077 = vpop.f32.mrb[0].mxu0
  %v1078 = vpop.f32.mrb[0].mxu0
  %v1079 = vadd.f32 0.0, %v1078
  %v1080 = vpop.f32.mrb[0].mxu0
  %1081 = vmatprep.mubr.bf16.mxu0 0
  %1082 = vmatmul.mubr.bf16.gmra.mrb[0].mxu0 %v185
  %v1083 = vpop.f32.mrb[0].mxu0
  %v1084 = vadd.f32 0.0, %v1083
  %v1085 = vpop.f32.mrb[0].mxu0
  %v1086 = vpop.f32.mrb[0].mxu0
  %v1087 = vadd.f32 0.0, %v1086
  %v1088 = vpop.f32.mrb[0].mxu0
  %1089 = vmatprep.mubr.bf16.mxu0 0
  %1090 = vmatmul.mubr.bf16.gmra.mrb[0].mxu0 %v188
  %v1091 = vpop.f32.mrb[0].mxu0
  %v1092 = vadd.f32 0.0, %v1091
  %v1093 = vpop.f32.mrb[0].mxu0
  %v1094 = vpop.f32.mrb[0].mxu0
  %v1095 = vadd.f32 0.0, %v1094
  %v1096 = vpop.f32.mrb[0].mxu0
  %1097 = vmatprep.mubr.bf16.mxu0 0
  %1098 = vmatmul.mubr.bf16.gmra.mrb[0].mxu0 %v191
  %v1099 = vpop.f32.mrb[0].mxu0
  %v1100 = vadd.f32 0.0, %v1099
  %v1101 = vpop.f32.mrb[0].mxu0
  %v1102 = vpop.f32.mrb[0].mxu0
  %v1103 = vadd.f32 0.0, %v1102
  %v1104 = vpop.f32.mrb[0].mxu0
  %1105 = vmatprep.mubr.bf16.mxu0 0
  %1106 = vmatmul.mubr.bf16.gmra.mrb[0].mxu0 %v194
  %v1107 = vpop.f32.mrb[0].mxu0
  %v1108 = vadd.f32 0.0, %v1107
  %v1109 = vpop.f32.mrb[0].mxu0
  %v1110 = vpop.f32.mrb[0].mxu0
  %v1111 = vadd.f32 0.0, %v1110
  %v1112 = vpop.f32.mrb[0].mxu0
  %1113 = vmatprep.mubr.bf16.mxu0 0
  %1114 = vmatmul.mubr.bf16.gmra.mrb[0].mxu0 %v197
  %v1115 = vpop.f32.mrb[0].mxu0
  %v1116 = vadd.f32 0.0, %v1115
  %v1117 = vpop.f32.mrb[0].mxu0
  %v1118 = vpop.f32.mrb[0].mxu0
  %v1119 = vadd.f32 0.0, %v1118
  %v1120 = vpop.f32.mrb[0].mxu0
  %1121 = vdwg.mxu0
  %v1124 = vunpack.c.l.b16 %v955
  %v1125 = vunpack.c.l.b16 %v956
  %v1126 = vpack.c.b16 %v1125, %v1124
  %v1128 = vsel %vm418, %v1126, 0
  %1130 = vmatprep.subr.bf16.mxu0 0
  %1131 = vmatpush1.bf16.msra.mxu0 %v1128
  %1132 = vmatprep.subr.bf16.mxu0 0
  %1133 = vmatpush1.bf16.msra.mxu0 0
  %1134 = vmatprep.subr.bf16.mxu0 0
  %1135 = vmatpush1.bf16.msra.mxu0 0
  %1136 = vmatprep.subr.bf16.mxu0 0
  %1137 = vmatpush1.bf16.msra.mxu0 0
  %1138 = vmatprep.subr.bf16.mxu0 0
  %1139 = vmatpush1.bf16.msra.mxu0 0
  %1140 = vmatprep.subr.bf16.mxu0 0
  %1141 = vmatpush1.bf16.msra.mxu0 0
  %1142 = vmatprep.subr.bf16.mxu0 0
  %1143 = vmatpush1.bf16.msra.mxu0 0
  %1144 = vmatprep.subr.bf16.mxu0 0
  %1145 = vmatpush1.bf16.msra.mxu0 0
  %1146 = vmatprep.subr.bf16.mxu0 0
  %1147 = vmatpush1.bf16.msra.mxu0 0
  %1148 = vmatprep.subr.bf16.mxu0 0
  %1149 = vmatpush1.bf16.msra.mxu0 0
  %1150 = vmatprep.subr.bf16.mxu0 0
  %1151 = vmatpush1.bf16.msra.mxu0 0
  %1152 = vmatprep.subr.bf16.mxu0 0
  %1153 = vmatpush1.bf16.msra.mxu0 0
  %1154 = vmatprep.subr.bf16.mxu0 0
  %1155 = vmatpush1.bf16.msra.mxu0 0
  %1156 = vmatprep.subr.bf16.mxu0 0
  %1157 = vmatpush1.bf16.msra.mxu0 0
  %1158 = vmatprep.subr.bf16.mxu0 0
  %1159 = vmatpush1.bf16.msra.mxu0 0
  %1160 = vmatprep.subr.bf16.mxu0 0
  %1161 = vmatpush1.bf16.msra.mxu0 0
  %1162 = vmatprep.mubr.bf16.mxu0 0
  %1163 = vmatmul.mubr.bf16.gmra.mrb[0].mxu0 %v371
  %v1164 = vpop.f32.mrb[0].mxu0
  %v1165 = vadd.f32 %v996, %v1164
  %v1166 = vpop.f32.mrb[0].mxu0
  %v1167 = vpop.f32.mrb[0].mxu0
  %v1168 = vadd.f32 %v999, %v1167
  %v1169 = vpop.f32.mrb[0].mxu0
  %1170 = vmatprep.mubr.bf16.mxu0 0
  %1171 = vmatmul.mubr.bf16.gmra.mrb[0].mxu0 %v374
  %v1172 = vpop.f32.mrb[0].mxu0
  %v1173 = vadd.f32 %v1004, %v1172
  %v1174 = vpop.f32.mrb[0].mxu0
  %v1175 = vpop.f32.mrb[0].mxu0
  %v1176 = vadd.f32 %v1007, %v1175
  %v1177 = vpop.f32.mrb[0].mxu0
  %1178 = vmatprep.mubr.bf16.mxu0 0
  %1179 = vmatmul.mubr.bf16.gmra.mrb[0].mxu0 %v377
  %v1180 = vpop.f32.mrb[0].mxu0
  %v1181 = vadd.f32 %v1012, %v1180
  %v1182 = vpop.f32.mrb[0].mxu0
  %v1183 = vpop.f32.mrb[0].mxu0
  %v1184 = vadd.f32 %v1015, %v1183
  %v1185 = vpop.f32.mrb[0].mxu0
  %1186 = vmatprep.mubr.bf16.mxu0 0
  %1187 = vmatmul.mubr.bf16.gmra.mrb[0].mxu0 %v380
  %v1188 = vpop.f32.mrb[0].mxu0
  %v1189 = vadd.f32 %v1020, %v1188
  %v1190 = vpop.f32.mrb[0].mxu0
  %v1191 = vpop.f32.mrb[0].mxu0
  %v1192 = vadd.f32 %v1023, %v1191
  %v1193 = vpop.f32.mrb[0].mxu0
  %1194 = vmatprep.mubr.bf16.mxu0 0
  %1195 = vmatmul.mubr.bf16.gmra.mrb[0].mxu0 %v383
  %v1196 = vpop.f32.mrb[0].mxu0
  %v1197 = vadd.f32 %v1028, %v1196
  %v1198 = vpop.f32.mrb[0].mxu0
  %v1199 = vpop.f32.mrb[0].mxu0
  %v1200 = vadd.f32 %v1031, %v1199
  %v1201 = vpop.f32.mrb[0].mxu0
  %1202 = vmatprep.mubr.bf16.mxu0 0
  %1203 = vmatmul.mubr.bf16.gmra.mrb[0].mxu0 %v386
  %v1204 = vpop.f32.mrb[0].mxu0
  %v1205 = vadd.f32 %v1036, %v1204
  %v1206 = vpop.f32.mrb[0].mxu0
  %v1207 = vpop.f32.mrb[0].mxu0
  %v1208 = vadd.f32 %v1039, %v1207
  %v1209 = vpop.f32.mrb[0].mxu0
  %1210 = vmatprep.mubr.bf16.mxu0 0
  %1211 = vmatmul.mubr.bf16.gmra.mrb[0].mxu0 %v389
  %v1212 = vpop.f32.mrb[0].mxu0
  %v1213 = vadd.f32 %v1044, %v1212
  %v1214 = vpop.f32.mrb[0].mxu0
  %v1215 = vpop.f32.mrb[0].mxu0
  %v1216 = vadd.f32 %v1047, %v1215
  %v1217 = vpop.f32.mrb[0].mxu0
  %1218 = vmatprep.mubr.bf16.mxu0 0
  %1219 = vmatmul.mubr.bf16.gmra.mrb[0].mxu0 %v392
  %v1220 = vpop.f32.mrb[0].mxu0
  %v1221 = vadd.f32 %v1052, %v1220
  %v1222 = vpop.f32.mrb[0].mxu0
  %v1223 = vpop.f32.mrb[0].mxu0
  %v1224 = vadd.f32 %v1055, %v1223
  %v1225 = vpop.f32.mrb[0].mxu0
  %1226 = vmatprep.mubr.bf16.mxu0 0
  %1227 = vmatmul.mubr.bf16.gmra.mrb[0].mxu0 %v395
  %v1228 = vpop.f32.mrb[0].mxu0
  %v1229 = vadd.f32 %v1060, %v1228
  %v1230 = vpop.f32.mrb[0].mxu0
  %v1231 = vpop.f32.mrb[0].mxu0
  %v1232 = vadd.f32 %v1063, %v1231
  %v1233 = vpop.f32.mrb[0].mxu0
  %1234 = vmatprep.mubr.bf16.mxu0 0
  %1235 = vmatmul.mubr.bf16.gmra.mrb[0].mxu0 %v398
  %v1236 = vpop.f32.mrb[0].mxu0
  %v1237 = vadd.f32 %v1068, %v1236
  %v1238 = vpop.f32.mrb[0].mxu0
  %v1239 = vpop.f32.mrb[0].mxu0
  %v1240 = vadd.f32 %v1071, %v1239
  %v1241 = vpop.f32.mrb[0].mxu0
  %1242 = vmatprep.mubr.bf16.mxu0 0
  %1243 = vmatmul.mubr.bf16.gmra.mrb[0].mxu0 %v401
  %v1244 = vpop.f32.mrb[0].mxu0
  %v1245 = vadd.f32 %v1076, %v1244
  %v1246 = vpop.f32.mrb[0].mxu0
  %v1247 = vpop.f32.mrb[0].mxu0
  %v1248 = vadd.f32 %v1079, %v1247
  %v1249 = vpop.f32.mrb[0].mxu0
  %1250 = vmatprep.mubr.bf16.mxu0 0
  %1251 = vmatmul.mubr.bf16.gmra.mrb[0].mxu0 %v404
  %v1252 = vpop.f32.mrb[0].mxu0
  %v1253 = vadd.f32 %v1084, %v1252
  %v1254 = vpop.f32.mrb[0].mxu0
  %v1255 = vpop.f32.mrb[0].mxu0
  %v1256 = vadd.f32 %v1087, %v1255
  %v1257 = vpop.f32.mrb[0].mxu0
  %1258 = vmatprep.mubr.bf16.mxu0 0
  %1259 = vmatmul.mubr.bf16.gmra.mrb[0].mxu0 %v407
  %v1260 = vpop.f32.mrb[0].mxu0
  %v1261 = vadd.f32 %v1092, %v1260
  %v1262 = vpop.f32.mrb[0].mxu0
  %v1263 = vpop.f32.mrb[0].mxu0
  %v1264 = vadd.f32 %v1095, %v1263
  %v1265 = vpop.f32.mrb[0].mxu0
  %1266 = vmatprep.mubr.bf16.mxu0 0
  %1267 = vmatmul.mubr.bf16.gmra.mrb[0].mxu0 %v410
  %v1268 = vpop.f32.mrb[0].mxu0
  %v1269 = vadd.f32 %v1100, %v1268
  %v1270 = vpop.f32.mrb[0].mxu0
  %v1271 = vpop.f32.mrb[0].mxu0
  %v1272 = vadd.f32 %v1103, %v1271
  %v1273 = vpop.f32.mrb[0].mxu0
  %1274 = vmatprep.mubr.bf16.mxu0 0
  %1275 = vmatmul.mubr.bf16.gmra.mrb[0].mxu0 %v413
  %v1276 = vpop.f32.mrb[0].mxu0
  %v1277 = vadd.f32 %v1108, %v1276
  %v1278 = vpop.f32.mrb[0].mxu0
  %v1279 = vpop.f32.mrb[0].mxu0
  %v1280 = vadd.f32 %v1111, %v1279
  %v1281 = vpop.f32.mrb[0].mxu0
  %1282 = vmatprep.mubr.bf16.mxu0 0
  %1283 = vmatmul.mubr.bf16.gmra.mrb[0].mxu0 %v416
  %v1284 = vpop.f32.mrb[0].mxu0
  %v1285 = vadd.f32 %v1116, %v1284
  %v1286 = vpop.f32.mrb[0].mxu0
  %v1287 = vpop.f32.mrb[0].mxu0
  %v1288 = vadd.f32 %v1119, %v1287
  %v1289 = vpop.f32.mrb[0].mxu0
  %1290 = vdwg.mxu0
  %v1291 = vld [vmem:[%s10] sm:$0x1]
  %v1293 = vlaneseq
  %v1294 = vshrl.u32 %v1293, 7
  %v1295 = vsub.s32 0, %v1294
  %v1296 = vrot.slane %v1291, %v1295
  %v1298 = vadd.f32 %v1165, %v1296
  %v1299 = vadd.f32 %v1168, %v1296
  %v1300 = vadd.f32 %v1173, %v1296
  %v1301 = vadd.f32 %v1176, %v1296
  %v1302 = vadd.f32 %v1181, %v1296
  %v1303 = vadd.f32 %v1184, %v1296
  %v1304 = vadd.f32 %v1189, %v1296
  %v1305 = vadd.f32 %v1192, %v1296
  %v1306 = vadd.f32 %v1197, %v1296
  %v1307 = vadd.f32 %v1200, %v1296
  %v1308 = vadd.f32 %v1205, %v1296
  %v1309 = vadd.f32 %v1208, %v1296
  %v1310 = vadd.f32 %v1213, %v1296
  %v1311 = vadd.f32 %v1216, %v1296
  %v1312 = vadd.f32 %v1221, %v1296
  %v1313 = vadd.f32 %v1224, %v1296
  %v1314 = vadd.f32 %v1229, %v1296
  %v1315 = vadd.f32 %v1232, %v1296
  %v1316 = vadd.f32 %v1237, %v1296
  %v1317 = vadd.f32 %v1240, %v1296
  %v1318 = vadd.f32 %v1245, %v1296
  %v1319 = vadd.f32 %v1248, %v1296
  %v1320 = vadd.f32 %v1253, %v1296
  %v1321 = vadd.f32 %v1256, %v1296
  %v1322 = vadd.f32 %v1261, %v1296
  %v1323 = vadd.f32 %v1264, %v1296
  %v1324 = vadd.f32 %v1269, %v1296
  %v1325 = vadd.f32 %v1272, %v1296
  %v1326 = vadd.f32 %v1277, %v1296
  %v1327 = vadd.f32 %v1280, %v1296
  %v1328 = vadd.f32 %v1285, %v1296
  %v1329 = vadd.f32 %v1288, %v1296
  %v1330 = vmax.f32 %v1298, 0.0
  %v1331 = vmax.f32 %v1299, 0.0
  %v1332 = vmax.f32 %v1300, 0.0
  %v1333 = vmax.f32 %v1301, 0.0
  %v1334 = vmax.f32 %v1302, 0.0
  %v1335 = vmax.f32 %v1303, 0.0
  %v1336 = vmax.f32 %v1304, 0.0
  %v1337 = vmax.f32 %v1305, 0.0
  %v1338 = vmax.f32 %v1306, 0.0
  %v1339 = vmax.f32 %v1307, 0.0
  %v1340 = vmax.f32 %v1308, 0.0
  %v1341 = vmax.f32 %v1309, 0.0
  %v1342 = vmax.f32 %v1310, 0.0
  %v1343 = vmax.f32 %v1311, 0.0
  %v1344 = vmax.f32 %v1312, 0.0
  %v1345 = vmax.f32 %v1313, 0.0
  %v1346 = vmax.f32 %v1314, 0.0
  %v1347 = vmax.f32 %v1315, 0.0
  %v1348 = vmax.f32 %v1316, 0.0
  %v1349 = vmax.f32 %v1317, 0.0
  %v1350 = vmax.f32 %v1318, 0.0
  %v1351 = vmax.f32 %v1319, 0.0
  %v1352 = vmax.f32 %v1320, 0.0
  %v1353 = vmax.f32 %v1321, 0.0
  %v1354 = vmax.f32 %v1322, 0.0
  %v1355 = vmax.f32 %v1323, 0.0
  %v1356 = vmax.f32 %v1324, 0.0
  %v1357 = vmax.f32 %v1325, 0.0
  %v1358 = vmax.f32 %v1326, 0.0
  %v1359 = vmax.f32 %v1327, 0.0
  %v1360 = vmax.f32 %v1328, 0.0
  %v1361 = vmax.f32 %v1329, 0.0
  %v1362 = vpack.c.bf16 %v1331, %v1330
  %v1363 = vpack.c.bf16 %v1333, %v1332
  %v1364 = vpack.c.bf16 %v1335, %v1334
  %v1365 = vpack.c.bf16 %v1337, %v1336
  %v1366 = vpack.c.bf16 %v1339, %v1338
  %v1367 = vpack.c.bf16 %v1341, %v1340
  %v1368 = vpack.c.bf16 %v1343, %v1342
  %v1369 = vpack.c.bf16 %v1345, %v1344
  %v1370 = vpack.c.bf16 %v1347, %v1346
  %v1371 = vpack.c.bf16 %v1349, %v1348
  %v1372 = vpack.c.bf16 %v1351, %v1350
  %v1373 = vpack.c.bf16 %v1353, %v1352
  %v1374 = vpack.c.bf16 %v1355, %v1354
  %v1375 = vpack.c.bf16 %v1357, %v1356
  %v1376 = vpack.c.bf16 %v1359, %v1358
  %v1377 = vpack.c.bf16 %v1361, %v1360
  %v1378 = vld [vmem:[%s11] sm:$0xf]
  %v1379 = vld [vmem:[%s11 + $0x4] sm:$0xf]
  %v1380 = vld [vmem:[%s11 + $0x8] sm:$0xf]
  %v1381 = vld [vmem:[%s11 + $0xc] sm:$0xf]
  %v1382 = vld [vmem:[%s12] sm:$0x1]
  %v1384 = vlaneseq
  %v1385 = vshrl.u32 %v1384, 7
  %v1386 = vsub.s32 0, %v1385
  %v1387 = vrot.slane %v1382, %v1386
  %v1393 = vunpack.c.l.b16 %v1378
  %v1394 = vunpack.c.l.b16 %v1379
  %v1395 = vunpack.c.l.b16 %v1380
  %v1396 = vunpack.c.l.b16 %v1381
  %v1397 = vpack.c.b16 %v1394, %v1393
  %v1398 = vpack.c.b16 %v1396, %v1395
  %v1402 = vsel %vm693, %v1362, 0
  %v1405 = vsel %vm693, %v1363, 0
  %v1408 = vsel %vm693, %v1364, 0
  %v1411 = vsel %vm693, %v1365, 0
  %v1414 = vsel %vm693, %v1366, 0
  %v1417 = vsel %vm693, %v1367, 0
  %v1420 = vsel %vm693, %v1368, 0
  %v1423 = vsel %vm693, %v1369, 0
  %v1426 = vsel %vm693, %v1370, 0
  %v1429 = vsel %vm693, %v1371, 0
  %v1432 = vsel %vm693, %v1372, 0
  %v1435 = vsel %vm693, %v1373, 0
  %v1438 = vsel %vm693, %v1374, 0
  %v1441 = vsel %vm693, %v1375, 0
  %v1444 = vsel %vm693, %v1376, 0
  %v1447 = vsel %vm693, %v1377, 0
  %1449 = vmatprep.subr.bf16.mxu0 0
  %1450 = vmatpush1.bf16.msra.mxu0 %v1397
  %1451 = vmatprep.subr.bf16.mxu0 0
  %1452 = vmatpush1.bf16.msra.mxu0 %v1398
  %1453 = vmatprep.subr.bf16.mxu0 0
  %1454 = vmatpush1.bf16.msra.mxu0 0
  %1455 = vmatprep.subr.bf16.mxu0 0
  %1456 = vmatpush1.bf16.msra.mxu0 0
  %1457 = vmatprep.subr.bf16.mxu0 0
  %1458 = vmatpush1.bf16.msra.mxu0 0
  %1459 = vmatprep.subr.bf16.mxu0 0
  %1460 = vmatpush1.bf16.msra.mxu0 0
  %1461 = vmatprep.subr.bf16.mxu0 0
  %1462 = vmatpush1.bf16.msra.mxu0 0
  %1463 = vmatprep.subr.bf16.mxu0 0
  %1464 = vmatpush1.bf16.msra.mxu0 0
  %1465 = vmatprep.subr.bf16.mxu0 0
  %1466 = vmatpush1.bf16.msra.mxu0 0
  %1467 = vmatprep.subr.bf16.mxu0 0
  %1468 = vmatpush1.bf16.msra.mxu0 0
  %1469 = vmatprep.subr.bf16.mxu0 0
  %1470 = vmatpush1.bf16.msra.mxu0 0
  %1471 = vmatprep.subr.bf16.mxu0 0
  %1472 = vmatpush1.bf16.msra.mxu0 0
  %1473 = vmatprep.subr.bf16.mxu0 0
  %1474 = vmatpush1.bf16.msra.mxu0 0
  %1475 = vmatprep.subr.bf16.mxu0 0
  %1476 = vmatpush1.bf16.msra.mxu0 0
  %1477 = vmatprep.subr.bf16.mxu0 0
  %1478 = vmatpush1.bf16.msra.mxu0 0
  %1479 = vmatprep.subr.bf16.mxu0 0
  %1480 = vmatpush1.bf16.msra.mxu0 0
  %1481 = vmatprep.mubr.bf16.mxu0 0
  %1482 = vmatmul.mubr.bf16.gmra.mrb[0].mxu0 %v1402
  %v1483 = vpop.f32.mrb[0].mxu0
  %v1484 = vadd.f32 %v1387, %v1483
  %v1485 = vpop.f32.mrb[0].mxu0
  %v1486 = vpop.f32.mrb[0].mxu0
  %v1487 = vadd.f32 %v1387, %v1486
  %v1488 = vpop.f32.mrb[0].mxu0
  %1489 = vmatprep.mubr.bf16.mxu0 0
  %1490 = vmatmul.mubr.bf16.gmra.mrb[0].mxu0 %v1405
  %v1491 = vpop.f32.mrb[0].mxu0
  %v1492 = vadd.f32 %v1387, %v1491
  %v1493 = vpop.f32.mrb[0].mxu0
  %v1494 = vpop.f32.mrb[0].mxu0
  %v1495 = vadd.f32 %v1387, %v1494
  %v1496 = vpop.f32.mrb[0].mxu0
  %1497 = vmatprep.mubr.bf16.mxu0 0
  %1498 = vmatmul.mubr.bf16.gmra.mrb[0].mxu0 %v1408
  %v1499 = vpop.f32.mrb[0].mxu0
  %v1500 = vadd.f32 %v1387, %v1499
  %v1501 = vpop.f32.mrb[0].mxu0
  %v1502 = vpop.f32.mrb[0].mxu0
  %v1503 = vadd.f32 %v1387, %v1502
  %v1504 = vpop.f32.mrb[0].mxu0
  %1505 = vmatprep.mubr.bf16.mxu0 0
  %1506 = vmatmul.mubr.bf16.gmra.mrb[0].mxu0 %v1411
  %v1507 = vpop.f32.mrb[0].mxu0
  %v1508 = vadd.f32 %v1387, %v1507
  %v1509 = vpop.f32.mrb[0].mxu0
  %v1510 = vpop.f32.mrb[0].mxu0
  %v1511 = vadd.f32 %v1387, %v1510
  %v1512 = vpop.f32.mrb[0].mxu0
  %1513 = vmatprep.mubr.bf16.mxu0 0
  %1514 = vmatmul.mubr.bf16.gmra.mrb[0].mxu0 %v1414
  %v1515 = vpop.f32.mrb[0].mxu0
  %v1516 = vadd.f32 %v1387, %v1515
  %v1517 = vpop.f32.mrb[0].mxu0
  %v1518 = vpop.f32.mrb[0].mxu0
  %v1519 = vadd.f32 %v1387, %v1518
  %v1520 = vpop.f32.mrb[0].mxu0
  %1521 = vmatprep.mubr.bf16.mxu0 0
  %1522 = vmatmul.mubr.bf16.gmra.mrb[0].mxu0 %v1417
  %v1523 = vpop.f32.mrb[0].mxu0
  %v1524 = vadd.f32 %v1387, %v1523
  %v1525 = vpop.f32.mrb[0].mxu0
  %v1526 = vpop.f32.mrb[0].mxu0
  %v1527 = vadd.f32 %v1387, %v1526
  %v1528 = vpop.f32.mrb[0].mxu0
  %1529 = vmatprep.mubr.bf16.mxu0 0
  %1530 = vmatmul.mubr.bf16.gmra.mrb[0].mxu0 %v1420
  %v1531 = vpop.f32.mrb[0].mxu0
  %v1532 = vadd.f32 %v1387, %v1531
  %v1533 = vpop.f32.mrb[0].mxu0
  %v1534 = vpop.f32.mrb[0].mxu0
  %v1535 = vadd.f32 %v1387, %v1534
  %v1536 = vpop.f32.mrb[0].mxu0
  %1537 = vmatprep.mubr.bf16.mxu0 0
  %1538 = vmatmul.mubr.bf16.gmra.mrb[0].mxu0 %v1423
  %v1539 = vpop.f32.mrb[0].mxu0
  %v1540 = vadd.f32 %v1387, %v1539
  %v1541 = vpop.f32.mrb[0].mxu0
  %v1542 = vpop.f32.mrb[0].mxu0
  %v1543 = vadd.f32 %v1387, %v1542
  %v1544 = vpop.f32.mrb[0].mxu0
  %1545 = vmatprep.mubr.bf16.mxu0 0
  %1546 = vmatmul.mubr.bf16.gmra.mrb[0].mxu0 %v1426
  %v1547 = vpop.f32.mrb[0].mxu0
  %v1548 = vadd.f32 %v1387, %v1547
  %v1549 = vpop.f32.mrb[0].mxu0
  %v1550 = vpop.f32.mrb[0].mxu0
  %v1551 = vadd.f32 %v1387, %v1550
  %v1552 = vpop.f32.mrb[0].mxu0
  %1553 = vmatprep.mubr.bf16.mxu0 0
  %1554 = vmatmul.mubr.bf16.gmra.mrb[0].mxu0 %v1429
  %v1555 = vpop.f32.mrb[0].mxu0
  %v1556 = vadd.f32 %v1387, %v1555
  %v1557 = vpop.f32.mrb[0].mxu0
  %v1558 = vpop.f32.mrb[0].mxu0
  %v1559 = vadd.f32 %v1387, %v1558
  %v1560 = vpop.f32.mrb[0].mxu0
  %1561 = vmatprep.mubr.bf16.mxu0 0
  %1562 = vmatmul.mubr.bf16.gmra.mrb[0].mxu0 %v1432
  %v1563 = vpop.f32.mrb[0].mxu0
  %v1564 = vadd.f32 %v1387, %v1563
  %v1565 = vpop.f32.mrb[0].mxu0
  %v1566 = vpop.f32.mrb[0].mxu0
  %v1567 = vadd.f32 %v1387, %v1566
  %v1568 = vpop.f32.mrb[0].mxu0
  %1569 = vmatprep.mubr.bf16.mxu0 0
  %1570 = vmatmul.mubr.bf16.gmra.mrb[0].mxu0 %v1435
  %v1571 = vpop.f32.mrb[0].mxu0
  %v1572 = vadd.f32 %v1387, %v1571
  %v1573 = vpop.f32.mrb[0].mxu0
  %v1574 = vpop.f32.mrb[0].mxu0
  %v1575 = vadd.f32 %v1387, %v1574
  %v1576 = vpop.f32.mrb[0].mxu0
  %1577 = vmatprep.mubr.bf16.mxu0 0
  %1578 = vmatmul.mubr.bf16.gmra.mrb[0].mxu0 %v1438
  %v1579 = vpop.f32.mrb[0].mxu0
  %v1580 = vadd.f32 %v1387, %v1579
  %v1581 = vpop.f32.mrb[0].mxu0
  %v1582 = vpop.f32.mrb[0].mxu0
  %v1583 = vadd.f32 %v1387, %v1582
  %v1584 = vpop.f32.mrb[0].mxu0
  %1585 = vmatprep.mubr.bf16.mxu0 0
  %1586 = vmatmul.mubr.bf16.gmra.mrb[0].mxu0 %v1441
  %v1587 = vpop.f32.mrb[0].mxu0
  %v1588 = vadd.f32 %v1387, %v1587
  %v1589 = vpop.f32.mrb[0].mxu0
  %v1590 = vpop.f32.mrb[0].mxu0
  %v1591 = vadd.f32 %v1387, %v1590
  %v1592 = vpop.f32.mrb[0].mxu0
  %1593 = vmatprep.mubr.bf16.mxu0 0
  %1594 = vmatmul.mubr.bf16.gmra.mrb[0].mxu0 %v1444
  %v1595 = vpop.f32.mrb[0].mxu0
  %v1596 = vadd.f32 %v1387, %v1595
  %v1597 = vpop.f32.mrb[0].mxu0
  %v1598 = vpop.f32.mrb[0].mxu0
  %v1599 = vadd.f32 %v1387, %v1598
  %v1600 = vpop.f32.mrb[0].mxu0
  %1601 = vmatprep.mubr.bf16.mxu0 0
  %1602 = vmatmul.mubr.bf16.gmra.mrb[0].mxu0 %v1447
  %v1603 = vpop.f32.mrb[0].mxu0
  %v1604 = vadd.f32 %v1387, %v1603
  %v1605 = vpop.f32.mrb[0].mxu0
  %v1606 = vpop.f32.mrb[0].mxu0
  %v1607 = vadd.f32 %v1387, %v1606
  %v1608 = vpop.f32.mrb[0].mxu0
  %1609 = vdwg.mxu0
  %v1610 = vmax.f32 %v1484, 0.0
  %v1611 = vmax.f32 %v1487, 0.0
  %v1612 = vmax.f32 %v1492, 0.0
  %v1613 = vmax.f32 %v1495, 0.0
  %v1614 = vmax.f32 %v1500, 0.0
  %v1615 = vmax.f32 %v1503, 0.0
  %v1616 = vmax.f32 %v1508, 0.0
  %v1617 = vmax.f32 %v1511, 0.0
  %v1618 = vmax.f32 %v1516, 0.0
  %v1619 = vmax.f32 %v1519, 0.0
  %v1620 = vmax.f32 %v1524, 0.0
  %v1621 = vmax.f32 %v1527, 0.0
  %v1622 = vmax.f32 %v1532, 0.0
  %v1623 = vmax.f32 %v1535, 0.0
  %v1624 = vmax.f32 %v1540, 0.0
  %v1625 = vmax.f32 %v1543, 0.0
  %v1626 = vmax.f32 %v1548, 0.0
  %v1627 = vmax.f32 %v1551, 0.0
  %v1628 = vmax.f32 %v1556, 0.0
  %v1629 = vmax.f32 %v1559, 0.0
  %v1630 = vmax.f32 %v1564, 0.0
  %v1631 = vmax.f32 %v1567, 0.0
  %v1632 = vmax.f32 %v1572, 0.0
  %v1633 = vmax.f32 %v1575, 0.0
  %v1634 = vmax.f32 %v1580, 0.0
  %v1635 = vmax.f32 %v1583, 0.0
  %v1636 = vmax.f32 %v1588, 0.0
  %v1637 = vmax.f32 %v1591, 0.0
  %v1638 = vmax.f32 %v1596, 0.0
  %v1639 = vmax.f32 %v1599, 0.0
  %v1640 = vmax.f32 %v1604, 0.0
  %v1641 = vmax.f32 %v1607, 0.0
  %v1642 = vpack.c.bf16 %v1611, %v1610
  %v1643 = vpack.c.bf16 %v1613, %v1612
  %v1644 = vpack.c.bf16 %v1615, %v1614
  %v1645 = vpack.c.bf16 %v1617, %v1616
  %v1646 = vpack.c.bf16 %v1619, %v1618
  %v1647 = vpack.c.bf16 %v1621, %v1620
  %v1648 = vpack.c.bf16 %v1623, %v1622
  %v1649 = vpack.c.bf16 %v1625, %v1624
  %v1650 = vpack.c.bf16 %v1627, %v1626
  %v1651 = vpack.c.bf16 %v1629, %v1628
  %v1652 = vpack.c.bf16 %v1631, %v1630
  %v1653 = vpack.c.bf16 %v1633, %v1632
  %v1654 = vpack.c.bf16 %v1635, %v1634
  %v1655 = vpack.c.bf16 %v1637, %v1636
  %v1656 = vpack.c.bf16 %v1639, %v1638
  %v1657 = vpack.c.bf16 %v1641, %v1640
  %v1658 = vld [vmem:[%s13] sm:$0xf]
  %v1659 = vld [vmem:[%s13 + $0x4] sm:$0xf]
  %v1660 = vld [vmem:[%s13 + $0x8] sm:$0xf]
  %v1661 = vld [vmem:[%s13 + $0xc] sm:$0xf]
  %v1666 = vunpack.c.l.b16 %v1658
  %v1667 = vunpack.c.l.b16 %v1659
  %v1668 = vunpack.c.l.b16 %v1660
  %v1669 = vunpack.c.l.b16 %v1661
  %v1670 = vpack.c.b16 %v1667, %v1666
  %v1671 = vpack.c.b16 %v1669, %v1668
  %v1675 = vsel %vm693, %v1642, 0
  %v1678 = vsel %vm693, %v1643, 0
  %v1681 = vsel %vm693, %v1644, 0
  %v1684 = vsel %vm693, %v1645, 0
  %v1687 = vsel %vm693, %v1646, 0
  %v1690 = vsel %vm693, %v1647, 0
  %v1693 = vsel %vm693, %v1648, 0
  %v1696 = vsel %vm693, %v1649, 0
  %v1699 = vsel %vm693, %v1650, 0
  %v1702 = vsel %vm693, %v1651, 0
  %v1705 = vsel %vm693, %v1652, 0
  %v1708 = vsel %vm693, %v1653, 0
  %v1711 = vsel %vm693, %v1654, 0
  %v1714 = vsel %vm693, %v1655, 0
  %v1717 = vsel %vm693, %v1656, 0
  %v1720 = vsel %vm693, %v1657, 0
  %1722 = vmatprep.subr.bf16.mxu0 0
  %1723 = vmatpush1.bf16.msra.mxu0 %v1670
  %1724 = vmatprep.subr.bf16.mxu0 0
  %1725 = vmatpush1.bf16.msra.mxu0 %v1671
  %1726 = vmatprep.subr.bf16.mxu0 0
  %1727 = vmatpush1.bf16.msra.mxu0 0
  %1728 = vmatprep.subr.bf16.mxu0 0
  %1729 = vmatpush1.bf16.msra.mxu0 0
  %1730 = vmatprep.subr.bf16.mxu0 0
  %1731 = vmatpush1.bf16.msra.mxu0 0
  %1732 = vmatprep.subr.bf16.mxu0 0
  %1733 = vmatpush1.bf16.msra.mxu0 0
  %1734 = vmatprep.subr.bf16.mxu0 0
  %1735 = vmatpush1.bf16.msra.mxu0 0
  %1736 = vmatprep.subr.bf16.mxu0 0
  %1737 = vmatpush1.bf16.msra.mxu0 0
  %1738 = vmatprep.subr.bf16.mxu0 0
  %1739 = vmatpush1.bf16.msra.mxu0 0
  %1740 = vmatprep.subr.bf16.mxu0 0
  %1741 = vmatpush1.bf16.msra.mxu0 0
  %1742 = vmatprep.subr.bf16.mxu0 0
  %1743 = vmatpush1.bf16.msra.mxu0 0
  %1744 = vmatprep.subr.bf16.mxu0 0
  %1745 = vmatpush1.bf16.msra.mxu0 0
  %1746 = vmatprep.subr.bf16.mxu0 0
  %1747 = vmatpush1.bf16.msra.mxu0 0
  %1748 = vmatprep.subr.bf16.mxu0 0
  %1749 = vmatpush1.bf16.msra.mxu0 0
  %1750 = vmatprep.subr.bf16.mxu0 0
  %1751 = vmatpush1.bf16.msra.mxu0 0
  %1752 = vmatprep.subr.bf16.mxu0 0
  %1753 = vmatpush1.bf16.msra.mxu0 0
  %1754 = vmatprep.mubr.bf16.mxu0 0
  %1755 = vmatmul.mubr.bf16.gmra.mrb[0].mxu0 %v1675
  %v1756 = vpop.f32.mrb[0].mxu0
  %v1757 = vadd.f32 0.0, %v1756
  %v1758 = vpop.f32.mrb[0].mxu0
  %v1759 = vpop.f32.mrb[0].mxu0
  %v1760 = vadd.f32 0.0, %v1759
  %v1761 = vpop.f32.mrb[0].mxu0
  %1762 = vmatprep.mubr.bf16.mxu0 0
  %1763 = vmatmul.mubr.bf16.gmra.mrb[0].mxu0 %v1678
  %v1764 = vpop.f32.mrb[0].mxu0
  %v1765 = vadd.f32 0.0, %v1764
  %v1766 = vpop.f32.mrb[0].mxu0
  %v1767 = vpop.f32.mrb[0].mxu0
  %v1768 = vadd.f32 0.0, %v1767
  %v1769 = vpop.f32.mrb[0].mxu0
  %1770 = vmatprep.mubr.bf16.mxu0 0
  %1771 = vmatmul.mubr.bf16.gmra.mrb[0].mxu0 %v1681
  %v1772 = vpop.f32.mrb[0].mxu0
  %v1773 = vadd.f32 0.0, %v1772
  %v1774 = vpop.f32.mrb[0].mxu0
  %v1775 = vpop.f32.mrb[0].mxu0
  %v1776 = vadd.f32 0.0, %v1775
  %v1777 = vpop.f32.mrb[0].mxu0
  %1778 = vmatprep.mubr.bf16.mxu0 0
  %1779 = vmatmul.mubr.bf16.gmra.mrb[0].mxu0 %v1684
  %v1780 = vpop.f32.mrb[0].mxu0
  %v1781 = vadd.f32 0.0, %v1780
  %v1782 = vpop.f32.mrb[0].mxu0
  %v1783 = vpop.f32.mrb[0].mxu0
  %v1784 = vadd.f32 0.0, %v1783
  %v1785 = vpop.f32.mrb[0].mxu0
  %1786 = vmatprep.mubr.bf16.mxu0 0
  %1787 = vmatmul.mubr.bf16.gmra.mrb[0].mxu0 %v1687
  %v1788 = vpop.f32.mrb[0].mxu0
  %v1789 = vadd.f32 0.0, %v1788
  %v1790 = vpop.f32.mrb[0].mxu0
  %v1791 = vpop.f32.mrb[0].mxu0
  %v1792 = vadd.f32 0.0, %v1791
  %v1793 = vpop.f32.mrb[0].mxu0
  %1794 = vmatprep.mubr.bf16.mxu0 0
  %1795 = vmatmul.mubr.bf16.gmra.mrb[0].mxu0 %v1690
  %v1796 = vpop.f32.mrb[0].mxu0
  %v1797 = vadd.f32 0.0, %v1796
  %v1798 = vpop.f32.mrb[0].mxu0
  %v1799 = vpop.f32.mrb[0].mxu0
  %v1800 = vadd.f32 0.0, %v1799
  %v1801 = vpop.f32.mrb[0].mxu0
  %1802 = vmatprep.mubr.bf16.mxu0 0
  %1803 = vmatmul.mubr.bf16.gmra.mrb[0].mxu0 %v1693
  %v1804 = vpop.f32.mrb[0].mxu0
  %v1805 = vadd.f32 0.0, %v1804
  %v1806 = vpop.f32.mrb[0].mxu0
  %v1807 = vpop.f32.mrb[0].mxu0
  %v1808 = vadd.f32 0.0, %v1807
  %v1809 = vpop.f32.mrb[0].mxu0
  %1810 = vmatprep.mubr.bf16.mxu0 0
  %1811 = vmatmul.mubr.bf16.gmra.mrb[0].mxu0 %v1696
  %v1812 = vpop.f32.mrb[0].mxu0
  %v1813 = vadd.f32 0.0, %v1812
  %v1814 = vpop.f32.mrb[0].mxu0
  %v1815 = vpop.f32.mrb[0].mxu0
  %v1816 = vadd.f32 0.0, %v1815
  %v1817 = vpop.f32.mrb[0].mxu0
  %1818 = vmatprep.mubr.bf16.mxu0 0
  %1819 = vmatmul.mubr.bf16.gmra.mrb[0].mxu0 %v1699
  %v1820 = vpop.f32.mrb[0].mxu0
  %v1821 = vadd.f32 0.0, %v1820
  %v1822 = vpop.f32.mrb[0].mxu0
  %v1823 = vpop.f32.mrb[0].mxu0
  %v1824 = vadd.f32 0.0, %v1823
  %v1825 = vpop.f32.mrb[0].mxu0
  %1826 = vmatprep.mubr.bf16.mxu0 0
  %1827 = vmatmul.mubr.bf16.gmra.mrb[0].mxu0 %v1702
  %v1828 = vpop.f32.mrb[0].mxu0
  %v1829 = vadd.f32 0.0, %v1828
  %v1830 = vpop.f32.mrb[0].mxu0
  %v1831 = vpop.f32.mrb[0].mxu0
  %v1832 = vadd.f32 0.0, %v1831
  %v1833 = vpop.f32.mrb[0].mxu0
  %1834 = vmatprep.mubr.bf16.mxu0 0
  %1835 = vmatmul.mubr.bf16.gmra.mrb[0].mxu0 %v1705
  %v1836 = vpop.f32.mrb[0].mxu0
  %v1837 = vadd.f32 0.0, %v1836
  %v1838 = vpop.f32.mrb[0].mxu0
  %v1839 = vpop.f32.mrb[0].mxu0
  %v1840 = vadd.f32 0.0, %v1839
  %v1841 = vpop.f32.mrb[0].mxu0
  %1842 = vmatprep.mubr.bf16.mxu0 0
  %1843 = vmatmul.mubr.bf16.gmra.mrb[0].mxu0 %v1708
  %v1844 = vpop.f32.mrb[0].mxu0
  %v1845 = vadd.f32 0.0, %v1844
  %v1846 = vpop.f32.mrb[0].mxu0
  %v1847 = vpop.f32.mrb[0].mxu0
  %v1848 = vadd.f32 0.0, %v1847
  %v1849 = vpop.f32.mrb[0].mxu0
  %1850 = vmatprep.mubr.bf16.mxu0 0
  %1851 = vmatmul.mubr.bf16.gmra.mrb[0].mxu0 %v1711
  %v1852 = vpop.f32.mrb[0].mxu0
  %v1853 = vadd.f32 0.0, %v1852
  %v1854 = vpop.f32.mrb[0].mxu0
  %v1855 = vpop.f32.mrb[0].mxu0
  %v1856 = vadd.f32 0.0, %v1855
  %v1857 = vpop.f32.mrb[0].mxu0
  %1858 = vmatprep.mubr.bf16.mxu0 0
  %1859 = vmatmul.mubr.bf16.gmra.mrb[0].mxu0 %v1714
  %v1860 = vpop.f32.mrb[0].mxu0
  %v1861 = vadd.f32 0.0, %v1860
  %v1862 = vpop.f32.mrb[0].mxu0
  %v1863 = vpop.f32.mrb[0].mxu0
  %v1864 = vadd.f32 0.0, %v1863
  %v1865 = vpop.f32.mrb[0].mxu0
  %1866 = vmatprep.mubr.bf16.mxu0 0
  %1867 = vmatmul.mubr.bf16.gmra.mrb[0].mxu0 %v1717
  %v1868 = vpop.f32.mrb[0].mxu0
  %v1869 = vadd.f32 0.0, %v1868
  %v1870 = vpop.f32.mrb[0].mxu0
  %v1871 = vpop.f32.mrb[0].mxu0
  %v1872 = vadd.f32 0.0, %v1871
  %v1873 = vpop.f32.mrb[0].mxu0
  %1874 = vmatprep.mubr.bf16.mxu0 0
  %1875 = vmatmul.mubr.bf16.gmra.mrb[0].mxu0 %v1720
  %v1876 = vpop.f32.mrb[0].mxu0
  %v1877 = vadd.f32 0.0, %v1876
  %v1878 = vpop.f32.mrb[0].mxu0
  %v1879 = vpop.f32.mrb[0].mxu0
  %v1880 = vadd.f32 0.0, %v1879
  %v1881 = vpop.f32.mrb[0].mxu0
  %1882 = vdwg.mxu0
  %v1887 = vunpack.c.l.b16 %v951
  %v1888 = vunpack.c.l.b16 %v952
  %v1889 = vunpack.c.l.b16 %v953
  %v1890 = vunpack.c.l.b16 %v954
  %v1891 = vpack.c.b16 %v1888, %v1887
  %v1892 = vpack.c.b16 %v1890, %v1889
  %v1896 = vsel %vm693, %v935, 0
  %v1899 = vsel %vm693, %v936, 0
  %v1902 = vsel %vm693, %v937, 0
  %v1905 = vsel %vm693, %v938, 0
  %v1908 = vsel %vm693, %v939, 0
  %v1911 = vsel %vm693, %v940, 0
  %v1914 = vsel %vm693, %v941, 0
  %v1917 = vsel %vm693, %v942, 0
  %v1920 = vsel %vm693, %v943, 0
  %v1923 = vsel %vm693, %v944, 0
  %v1926 = vsel %vm693, %v945, 0
  %v1929 = vsel %vm693, %v946, 0
  %v1932 = vsel %vm693, %v947, 0
  %v1935 = vsel %vm693, %v948, 0
  %v1938 = vsel %vm693, %v949, 0
  %v1941 = vsel %vm693, %v950, 0
  %1943 = vmatprep.subr.bf16.mxu0 0
  %1944 = vmatpush1.bf16.msra.mxu0 %v1891
  %1945 = vmatprep.subr.bf16.mxu0 0
  %1946 = vmatpush1.bf16.msra.mxu0 %v1892
  %1947 = vmatprep.subr.bf16.mxu0 0
  %1948 = vmatpush1.bf16.msra.mxu0 0
  %1949 = vmatprep.subr.bf16.mxu0 0
  %1950 = vmatpush1.bf16.msra.mxu0 0
  %1951 = vmatprep.subr.bf16.mxu0 0
  %1952 = vmatpush1.bf16.msra.mxu0 0
  %1953 = vmatprep.subr.bf16.mxu0 0
  %1954 = vmatpush1.bf16.msra.mxu0 0
  %1955 = vmatprep.subr.bf16.mxu0 0
  %1956 = vmatpush1.bf16.msra.mxu0 0
  %1957 = vmatprep.subr.bf16.mxu0 0
  %1958 = vmatpush1.bf16.msra.mxu0 0
  %1959 = vmatprep.subr.bf16.mxu0 0
  %1960 = vmatpush1.bf16.msra.mxu0 0
  %1961 = vmatprep.subr.bf16.mxu0 0
  %1962 = vmatpush1.bf16.msra.mxu0 0
  %1963 = vmatprep.subr.bf16.mxu0 0
  %1964 = vmatpush1.bf16.msra.mxu0 0
  %1965 = vmatprep.subr.bf16.mxu0 0
  %1966 = vmatpush1.bf16.msra.mxu0 0
  %1967 = vmatprep.subr.bf16.mxu0 0
  %1968 = vmatpush1.bf16.msra.mxu0 0
  %1969 = vmatprep.subr.bf16.mxu0 0
  %1970 = vmatpush1.bf16.msra.mxu0 0
  %1971 = vmatprep.subr.bf16.mxu0 0
  %1972 = vmatpush1.bf16.msra.mxu0 0
  %1973 = vmatprep.subr.bf16.mxu0 0
  %1974 = vmatpush1.bf16.msra.mxu0 0
  %1975 = vmatprep.mubr.bf16.mxu0 0
  %1976 = vmatmul.mubr.bf16.gmra.mrb[0].mxu0 %v1896
  %v1977 = vpop.f32.mrb[0].mxu0
  %v1978 = vadd.f32 %v1757, %v1977
  %v1979 = vpop.f32.mrb[0].mxu0
  %v1980 = vpop.f32.mrb[0].mxu0
  %v1981 = vadd.f32 %v1760, %v1980
  %v1982 = vpop.f32.mrb[0].mxu0
  %1983 = vmatprep.mubr.bf16.mxu0 0
  %1984 = vmatmul.mubr.bf16.gmra.mrb[0].mxu0 %v1899
  %v1985 = vpop.f32.mrb[0].mxu0
  %v1986 = vadd.f32 %v1765, %v1985
  %v1987 = vpop.f32.mrb[0].mxu0
  %v1988 = vpop.f32.mrb[0].mxu0
  %v1989 = vadd.f32 %v1768, %v1988
  %v1990 = vpop.f32.mrb[0].mxu0
  %1991 = vmatprep.mubr.bf16.mxu0 0
  %1992 = vmatmul.mubr.bf16.gmra.mrb[0].mxu0 %v1902
  %v1993 = vpop.f32.mrb[0].mxu0
  %v1994 = vadd.f32 %v1773, %v1993
  %v1995 = vpop.f32.mrb[0].mxu0
  %v1996 = vpop.f32.mrb[0].mxu0
  %v1997 = vadd.f32 %v1776, %v1996
  %v1998 = vpop.f32.mrb[0].mxu0
  %1999 = vmatprep.mubr.bf16.mxu0 0
  %2000 = vmatmul.mubr.bf16.gmra.mrb[0].mxu0 %v1905
  %v2001 = vpop.f32.mrb[0].mxu0
  %v2002 = vadd.f32 %v1781, %v2001
  %v2003 = vpop.f32.mrb[0].mxu0
  %v2004 = vpop.f32.mrb[0].mxu0
  %v2005 = vadd.f32 %v1784, %v2004
  %v2006 = vpop.f32.mrb[0].mxu0
  %2007 = vmatprep.mubr.bf16.mxu0 0
  %2008 = vmatmul.mubr.bf16.gmra.mrb[0].mxu0 %v1908
  %v2009 = vpop.f32.mrb[0].mxu0
  %v2010 = vadd.f32 %v1789, %v2009
  %v2011 = vpop.f32.mrb[0].mxu0
  %v2012 = vpop.f32.mrb[0].mxu0
  %v2013 = vadd.f32 %v1792, %v2012
  %v2014 = vpop.f32.mrb[0].mxu0
  %2015 = vmatprep.mubr.bf16.mxu0 0
  %2016 = vmatmul.mubr.bf16.gmra.mrb[0].mxu0 %v1911
  %v2017 = vpop.f32.mrb[0].mxu0
  %v2018 = vadd.f32 %v1797, %v2017
  %v2019 = vpop.f32.mrb[0].mxu0
  %v2020 = vpop.f32.mrb[0].mxu0
  %v2021 = vadd.f32 %v1800, %v2020
  %v2022 = vpop.f32.mrb[0].mxu0
  %2023 = vmatprep.mubr.bf16.mxu0 0
  %2024 = vmatmul.mubr.bf16.gmra.mrb[0].mxu0 %v1914
  %v2025 = vpop.f32.mrb[0].mxu0
  %v2026 = vadd.f32 %v1805, %v2025
  %v2027 = vpop.f32.mrb[0].mxu0
  %v2028 = vpop.f32.mrb[0].mxu0
  %v2029 = vadd.f32 %v1808, %v2028
  %v2030 = vpop.f32.mrb[0].mxu0
  %2031 = vmatprep.mubr.bf16.mxu0 0
  %2032 = vmatmul.mubr.bf16.gmra.mrb[0].mxu0 %v1917
  %v2033 = vpop.f32.mrb[0].mxu0
  %v2034 = vadd.f32 %v1813, %v2033
  %v2035 = vpop.f32.mrb[0].mxu0
  %v2036 = vpop.f32.mrb[0].mxu0
  %v2037 = vadd.f32 %v1816, %v2036
  %v2038 = vpop.f32.mrb[0].mxu0
  %2039 = vmatprep.mubr.bf16.mxu0 0
  %2040 = vmatmul.mubr.bf16.gmra.mrb[0].mxu0 %v1920
  %v2041 = vpop.f32.mrb[0].mxu0
  %v2042 = vadd.f32 %v1821, %v2041
  %v2043 = vpop.f32.mrb[0].mxu0
  %v2044 = vpop.f32.mrb[0].mxu0
  %v2045 = vadd.f32 %v1824, %v2044
  %v2046 = vpop.f32.mrb[0].mxu0
  %2047 = vmatprep.mubr.bf16.mxu0 0
  %2048 = vmatmul.mubr.bf16.gmra.mrb[0].mxu0 %v1923
  %v2049 = vpop.f32.mrb[0].mxu0
  %v2050 = vadd.f32 %v1829, %v2049
  %v2051 = vpop.f32.mrb[0].mxu0
  %v2052 = vpop.f32.mrb[0].mxu0
  %v2053 = vadd.f32 %v1832, %v2052
  %v2054 = vpop.f32.mrb[0].mxu0
  %2055 = vmatprep.mubr.bf16.mxu0 0
  %2056 = vmatmul.mubr.bf16.gmra.mrb[0].mxu0 %v1926
  %v2057 = vpop.f32.mrb[0].mxu0
  %v2058 = vadd.f32 %v1837, %v2057
  %v2059 = vpop.f32.mrb[0].mxu0
  %v2060 = vpop.f32.mrb[0].mxu0
  %v2061 = vadd.f32 %v1840, %v2060
  %v2062 = vpop.f32.mrb[0].mxu0
  %2063 = vmatprep.mubr.bf16.mxu0 0
  %2064 = vmatmul.mubr.bf16.gmra.mrb[0].mxu0 %v1929
  %v2065 = vpop.f32.mrb[0].mxu0
  %v2066 = vadd.f32 %v1845, %v2065
  %v2067 = vpop.f32.mrb[0].mxu0
  %v2068 = vpop.f32.mrb[0].mxu0
  %v2069 = vadd.f32 %v1848, %v2068
  %v2070 = vpop.f32.mrb[0].mxu0
  %2071 = vmatprep.mubr.bf16.mxu0 0
  %2072 = vmatmul.mubr.bf16.gmra.mrb[0].mxu0 %v1932
  %v2073 = vpop.f32.mrb[0].mxu0
  %v2074 = vadd.f32 %v1853, %v2073
  %v2075 = vpop.f32.mrb[0].mxu0
  %v2076 = vpop.f32.mrb[0].mxu0
  %v2077 = vadd.f32 %v1856, %v2076
  %v2078 = vpop.f32.mrb[0].mxu0
  %2079 = vmatprep.mubr.bf16.mxu0 0
  %2080 = vmatmul.mubr.bf16.gmra.mrb[0].mxu0 %v1935
  %v2081 = vpop.f32.mrb[0].mxu0
  %v2082 = vadd.f32 %v1861, %v2081
  %v2083 = vpop.f32.mrb[0].mxu0
  %v2084 = vpop.f32.mrb[0].mxu0
  %v2085 = vadd.f32 %v1864, %v2084
  %v2086 = vpop.f32.mrb[0].mxu0
  %2087 = vmatprep.mubr.bf16.mxu0 0
  %2088 = vmatmul.mubr.bf16.gmra.mrb[0].mxu0 %v1938
  %v2089 = vpop.f32.mrb[0].mxu0
  %v2090 = vadd.f32 %v1869, %v2089
  %v2091 = vpop.f32.mrb[0].mxu0
  %v2092 = vpop.f32.mrb[0].mxu0
  %v2093 = vadd.f32 %v1872, %v2092
  %v2094 = vpop.f32.mrb[0].mxu0
  %2095 = vmatprep.mubr.bf16.mxu0 0
  %2096 = vmatmul.mubr.bf16.gmra.mrb[0].mxu0 %v1941
  %v2097 = vpop.f32.mrb[0].mxu0
  %v2098 = vadd.f32 %v1877, %v2097
  %v2099 = vpop.f32.mrb[0].mxu0
  %v2100 = vpop.f32.mrb[0].mxu0
  %v2101 = vadd.f32 %v1880, %v2100
  %v2102 = vpop.f32.mrb[0].mxu0
  %2103 = vdwg.mxu0
  %v2104 = vld [vmem:[%s14] sm:$0x1]
  %v2106 = vlaneseq
  %v2107 = vshrl.u32 %v2106, 7
  %v2108 = vsub.s32 0, %v2107
  %v2109 = vrot.slane %v2104, %v2108
  %v2111 = vadd.f32 %v1978, %v2109
  %v2112 = vadd.f32 %v1981, %v2109
  %v2113 = vadd.f32 %v1986, %v2109
  %v2114 = vadd.f32 %v1989, %v2109
  %v2115 = vadd.f32 %v1994, %v2109
  %v2116 = vadd.f32 %v1997, %v2109
  %v2117 = vadd.f32 %v2002, %v2109
  %v2118 = vadd.f32 %v2005, %v2109
  %v2119 = vadd.f32 %v2010, %v2109
  %v2120 = vadd.f32 %v2013, %v2109
  %v2121 = vadd.f32 %v2018, %v2109
  %v2122 = vadd.f32 %v2021, %v2109
  %v2123 = vadd.f32 %v2026, %v2109
  %v2124 = vadd.f32 %v2029, %v2109
  %v2125 = vadd.f32 %v2034, %v2109
  %v2126 = vadd.f32 %v2037, %v2109
  %v2127 = vadd.f32 %v2042, %v2109
  %v2128 = vadd.f32 %v2045, %v2109
  %v2129 = vadd.f32 %v2050, %v2109
  %v2130 = vadd.f32 %v2053, %v2109
  %v2131 = vadd.f32 %v2058, %v2109
  %v2132 = vadd.f32 %v2061, %v2109
  %v2133 = vadd.f32 %v2066, %v2109
  %v2134 = vadd.f32 %v2069, %v2109
  %v2135 = vadd.f32 %v2074, %v2109
  %v2136 = vadd.f32 %v2077, %v2109
  %v2137 = vadd.f32 %v2082, %v2109
  %v2138 = vadd.f32 %v2085, %v2109
  %v2139 = vadd.f32 %v2090, %v2109
  %v2140 = vadd.f32 %v2093, %v2109
  %v2141 = vadd.f32 %v2098, %v2109
  %v2142 = vadd.f32 %v2101, %v2109
  %vm2143 = vcmask 15360
  %2144 = vst.msk [vmem:[%s15] sm:$0xff] %vm2143, %v2111
  %2145 = vst.msk [vmem:[%s15 + $0x8] sm:$0xff] %vm2143, %v2112
  %2146 = vst.msk [vmem:[%s15 + $0x10] sm:$0xff] %vm2143, %v2113
  %2147 = vst.msk [vmem:[%s15 + $0x18] sm:$0xff] %vm2143, %v2114
  %2148 = vst.msk [vmem:[%s15 + $0x20] sm:$0xff] %vm2143, %v2115
  %2149 = vst.msk [vmem:[%s15 + $0x28] sm:$0xff] %vm2143, %v2116
  %2150 = vst.msk [vmem:[%s15 + $0x30] sm:$0xff] %vm2143, %v2117
  %2151 = vst.msk [vmem:[%s15 + $0x38] sm:$0xff] %vm2143, %v2118
  %2152 = vst.msk [vmem:[%s15 + $0x40] sm:$0xff] %vm2143, %v2119
  %2153 = vst.msk [vmem:[%s15 + $0x48] sm:$0xff] %vm2143, %v2120
  %2154 = vst.msk [vmem:[%s15 + $0x50] sm:$0xff] %vm2143, %v2121
  %2155 = vst.msk [vmem:[%s15 + $0x58] sm:$0xff] %vm2143, %v2122
  %2156 = vst.msk [vmem:[%s15 + $0x60] sm:$0xff] %vm2143, %v2123
  %2157 = vst.msk [vmem:[%s15 + $0x68] sm:$0xff] %vm2143, %v2124
  %2158 = vst.msk [vmem:[%s15 + $0x70] sm:$0xff] %vm2143, %v2125
  %2159 = vst.msk [vmem:[%s15 + $0x78] sm:$0xff] %vm2143, %v2126
  %2160 = vst.msk [vmem:[%s15 + $0x80] sm:$0xff] %vm2143, %v2127
  %2161 = vst.msk [vmem:[%s15 + $0x88] sm:$0xff] %vm2143, %v2128
  %2162 = vst.msk [vmem:[%s15 + $0x90] sm:$0xff] %vm2143, %v2129
  %2163 = vst.msk [vmem:[%s15 + $0x98] sm:$0xff] %vm2143, %v2130
  %2164 = vst.msk [vmem:[%s15 + $0xa0] sm:$0xff] %vm2143, %v2131
  %2165 = vst.msk [vmem:[%s15 + $0xa8] sm:$0xff] %vm2143, %v2132
  %2166 = vst.msk [vmem:[%s15 + $0xb0] sm:$0xff] %vm2143, %v2133
  %2167 = vst.msk [vmem:[%s15 + $0xb8] sm:$0xff] %vm2143, %v2134
  %2168 = vst.msk [vmem:[%s15 + $0xc0] sm:$0xff] %vm2143, %v2135
  %2169 = vst.msk [vmem:[%s15 + $0xc8] sm:$0xff] %vm2143, %v2136
  %2170 = vst.msk [vmem:[%s15 + $0xd0] sm:$0xff] %vm2143, %v2137
  %2171 = vst.msk [vmem:[%s15 + $0xd8] sm:$0xff] %vm2143, %v2138
  %2172 = vst.msk [vmem:[%s15 + $0xe0] sm:$0xff] %vm2143, %v2139
  %2173 = vst.msk [vmem:[%s15 + $0xe8] sm:$0xff] %vm2143, %v2140
  %2174 = vst.msk [vmem:[%s15 + $0xf0] sm:$0xff] %vm2143, %v2141
  %2175 = vst.msk [vmem:[%s15 + $0xf8] sm:$0xff] %vm2143, %v2142
  // Predicated region
  $region62: #{tpu_custom_call.1} parent=0 // pred_check
    _
  $region63: #{tpu_custom_call.1} parent=0 // pred_check_branch
    %2177 = sbr.rel (0) target = $region65
  $region64: #{tpu_custom_call.1} parent=0 // pred_region
    _
  $region65: #{tpu_custom_call.1} parent=0 // pred_fallthru
    _
  // Predicated region
  $region66: #{tpu_custom_call.1} parent=0 // pred_check
    _
  $region67: #{tpu_custom_call.1} parent=0 // pred_check_branch
    %2179 = sbr.rel (0) target = $region69
  $region68: #{tpu_custom_call.1} parent=0 // pred_region
    _
  $region69: #{tpu_custom_call.1} parent=0 // pred_fallthru
    _

</llo_original>
